<compile_context>
chip_gen: v7x
topology: tpu7x:2x2x1
jax: 0.10.0
libtpu: 0.0.40
codegen_flags: <defaults>
</compile_context>

<pallas_src>
import functools

import jax
import jax.numpy as jnp
from jax.experimental import pallas as pl
from jax.experimental.pallas import tpu as pltpu


# ----------------------------------------------------------------------------
# Pallas kernels
# ----------------------------------------------------------------------------
def _layer_norm(h, gamma, beta, eps=1e-5):
    # two-pass LayerNorm (matches nn.LayerNorm; avoids E[x^2]-E[x]^2 cancellation)
    mu = jnp.mean(h, axis=-1, keepdims=True)
    diff = h - mu
    var = jnp.mean(diff * diff, axis=-1, keepdims=True)
    return diff * jax.lax.rsqrt(var + eps) * gamma + beta


def _stream_block(x, wcat, r, vec, mm_dtype):
    """One stream on one row-tile.

    x    : (n, D)    mm_dtype  query rows
    wcat : (D, 2D)   mm_dtype  [W_in | W_out]
    r    : (D, D)    mm_dtype  rot_mat.T @ W_out
    vec  : (8, D)    f32       rows: b_in, g_in, be_in, (t@W_out + b_out), g_out, be_out, 0, 0
    """
    d = r.shape[0]
    # one wide matmul gives both x @ W_in and x @ W_out (fills 256 MXU lanes)
    u = jnp.dot(x, wcat, preferred_element_type=jnp.float32)            # (n, 2D) f32

    b_in, g_in, be_in = vec[0:1, :], vec[1:2, :], vec[2:3, :]
    b_fuse, g_out, be_out = vec[3:4, :], vec[4:5, :], vec[5:6, :]

    h = jnp.maximum(_layer_norm(u[:, :d] + b_in, g_in, be_in), 0.0)
    z = jnp.dot(h.astype(mm_dtype), r, preferred_element_type=jnp.float32)
    z = z + u[:, d:] + b_fuse
    return jnp.maximum(_layer_norm(z, g_out, be_out), 0.0)


def _fused_small_kernel(x_ref, wcat_ref, r_ref, vec_ref, o_ref, *, mm_dtype):
    """Tiny-N path: one grid step; the S(=3) streams are Python-unrolled to avoid
    per-grid-step launch / DMA-setup overhead (the kernel is overhead-bound at N~24)."""
    for si in range(x_ref.shape[0]):
        y = _stream_block(x_ref[si], wcat_ref[si], r_ref[si], vec_ref[si], mm_dtype)
        o_ref[si] = y.astype(o_ref.dtype)


def _fused_tiled_kernel(x_ref, wcat_ref, r_ref, vec_ref, o_ref, *, mm_dtype):
    """Large-N path: one (stream, n_tile) grid step (stream axis squeezed)."""
    y = _stream_block(x_ref[...], wcat_ref[...], r_ref[...], vec_ref[...], mm_dtype)
    o_ref[...] = y.astype(o_ref.dtype)


def fused_proj_rotate_proj(x3, w_cat, r_mat, vecs, *, mm_dtype=jnp.bfloat16,
                           small_n_max=512, tile_cap=512):
    """x3: (S, N, D) stacked queries.  Returns (S, N, D) float32, each stream equal to
       relu(LN((relu(LN(x@W_in+b_in)) @ rot_mat.T + trans_para + x) @ W_out + b_out))."""
    s, n, d = x3.shape
    if n == 0:
        return x3.astype(jnp.float32)

    x3m = x3.astype(mm_dtype)

    if n <= small_n_max:
        # ---- tiny-N path: single grid step, all weights resident in VMEM ----
        n_pad = max(8, ((n + 7) // 8) * 8)
        if n_pad != n:
            x3m = jnp.pad(x3m, ((0, 0), (0, n_pad - n), (0, 0)))
        out = pl.pallas_call(
            functools.partial(_fused_small_kernel, mm_dtype=mm_dtype),
            out_shape=jax.ShapeDtypeStruct((s, n_pad, d), jnp.float32),
            grid_spec=pltpu.PrefetchScalarGridSpec(
                num_scalar_prefetch=0,
                grid=(1,),
                in_specs=[
                    pl.BlockSpec((s, n_pad, d), lambda i: (0, 0, 0)),
                    pl.BlockSpec((s, d, 2 * d), lambda i: (0, 0, 0)),
                    pl.BlockSpec((s, d, d), lambda i: (0, 0, 0)),
                    pl.BlockSpec((s, 8, d), lambda i: (0, 0, 0)),
                ],
                out_specs=pl.BlockSpec((s, n_pad, d), lambda i: (0, 0, 0)),
            ),
        )(x3m, w_cat, r_mat, vecs)
        return out[:, :n] if n_pad != n else out

    # ---- large-N path: (stream, n_tile) grid, 512-row tiles ----
    tile_n = tile_cap
    n_pad = ((n + tile_n - 1) // tile_n) * tile_n
    if n_pad != n:
        x3m = jnp.pad(x3m, ((0, 0), (0, n_pad - n), (0, 0)))
    out = pl.pallas_call(
        functools.partial(_fused_tiled_kernel, mm_dtype=mm_dtype),
        out_shape=jax.ShapeDtypeStruct((s, n_pad, d), jnp.float32),
        grid_spec=pltpu.PrefetchScalarGridSpec(
            num_scalar_prefetch=0,
            grid=(s, n_pad // tile_n),
            in_specs=[
                pl.BlockSpec((pl.Squeezed(), tile_n, d), lambda si, ni: (si, ni, 0)),
                pl.BlockSpec((pl.Squeezed(), d, 2 * d), lambda si, ni: (si, 0, 0)),
                pl.BlockSpec((pl.Squeezed(), d, d), lambda si, ni: (si, 0, 0)),
                pl.BlockSpec((pl.Squeezed(), 8, d), lambda si, ni: (si, 0, 0)),
            ],
            out_specs=pl.BlockSpec((pl.Squeezed(), tile_n, d), lambda si, ni: (si, ni, 0)),
        ),
        # stream axis stays sequential (weights stay resident); the n-tile axis is
        # parallel so v7x megacore shards the big axis evenly (no-op on v5e/v6e).
        compiler_params=pltpu.CompilerParams(
            dimension_semantics=("arbitrary", "parallel")
        ),
    )(x3m, w_cat, r_mat, vecs)
    return out[:, :n] if n_pad != n else out


# ----------------------------------------------------------------------------
# Parameter packing: calib-independent part once, calib-dependent part per frame
# ----------------------------------------------------------------------------
def prepare_fused_params(params, *, use_bf16=True):
    """Done once at parameter-load time (not on the per-frame latency path)."""
    mm_dtype = jnp.bfloat16 if use_bf16 else jnp.float32
    in_projs = [params["feat_in"], params["embed_in"], params["motion_in"]]
    out_projs = [params["feat_out"], params["embed_out"], params["motion_out"]]
    w_cat = jnp.stack(
        [jnp.concatenate([ip["w"], op["w"]], axis=1) for ip, op in zip(in_projs, out_projs)]
    ).astype(mm_dtype)                                                # (S, D, 2D)
    w_out = jnp.stack([op["w"] for op in out_projs])                  # (S, D, D) f32
    zeros = jnp.zeros_like(in_projs[0]["b"])
    static_vecs = jnp.stack(
        [
            jnp.stack([ip["b"], ip["g"], ip["beta"], op["b"], op["g"], op["beta"], zeros, zeros])
            for ip, op in zip(in_projs, out_projs)
        ]
    )                                                                 # (S, 8, D) f32
    return dict(mm_dtype=mm_dtype, w_cat=w_cat, w_out=w_out, static_vecs=static_vecs)


def build_frame_params(prep, rot_mat_t, trans_para):
    """Per-frame folding: R = rot^T @ W_out,  b' = t @ W_out + b_out (exact algebra)."""
    r_mat = jnp.einsum("ij,sjk->sik", rot_mat_t, prep["w_out"]).astype(prep["mm_dtype"])
    b_delta = jnp.einsum("md,sdk->smk", trans_para, prep["w_out"])    # (S, 1, D)
    vecs = prep["static_vecs"].at[:, 3:4, :].add(b_delta)
    return r_mat, vecs


# ----------------------------------------------------------------------------
# Plain-JAX glue: MLPs (batch 1), block-diagonal fill, point transform + mask
# ----------------------------------------------------------------------------
def linear_ln_relu(x, p, eps=1e-5):
    h = x @ p["w"] + p["b"]
    mu = h.mean(-1, keepdims=True)
    var = ((h - mu) ** 2).mean(-1, keepdims=True)
    h = (h - mu) / jnp.sqrt(var + eps) * p["g"] + p["beta"]
    return jnp.maximum(h, 0.0)


def mlp_forward(layers, x):
    for p in layers:
        x = linear_ln_relu(x, p)
    return x


def fill_tensor(rot_para, head, embed_dims):
    """(1, head*k*k) -> (D, D) block-diagonal matrix (same fill order as torch)."""
    k = embed_dims // head
    blocks = rot_para.reshape(head, k, k)
    out = jnp.zeros((embed_dims, embed_dims), jnp.float32)
    for i in range(head):
        out = out.at[i * k:(i + 1) * k, i * k:(i + 1) * k].set(blocks[i])
    return out


def transform_pts(points, transformation, pc_range, inf_pc_range):
    x = points[:, 0:1] * (inf_pc_range[3] - inf_pc_range[0]) + inf_pc_range[0]
    y = points[:, 1:2] * (inf_pc_range[4] - inf_pc_range[1]) + inf_pc_range[1]
    z = points[:, 2:3] * (inf_pc_range[5] - inf_pc_range[2]) + inf_pc_range[2]
    locs = jnp.concatenate([x, y, z, jnp.ones_like(x)], axis=-1)          # (N, 4)
    locs = (transformation @ locs.T).T[:, :3]                             # (N, 3)
    mask = (
        (pc_range[0] <= locs[:, 0]) & (locs[:, 0] <= pc_range[3])
        & (pc_range[1] <= locs[:, 1]) & (locs[:, 1] <= pc_range[4])
    )
    # TODO(synk): dynamic-shape boolean filtering (jnp.nonzero) is eager-only; no Pallas equivalent.
    idx = jnp.nonzero(mask)[0]
    locs = locs[idx]
    locs = jnp.stack(
        [
            (locs[:, 0] - pc_range[0]) / (pc_range[3] - pc_range[0]),
            (locs[:, 1] - pc_range[1]) / (pc_range[4] - pc_range[1]),
            (locs[:, 2] - pc_range[2]) / (pc_range[5] - pc_range[2]),
        ],
        axis=-1,
    )
    return locs, mask, idx


# ----------------------------------------------------------------------------
# Parameter init (deterministic, synthetic).  Linear weights stored as (in, out).
# ----------------------------------------------------------------------------
def init_linear_ln(key, din, dout):
    kw, kb = jax.random.split(key)
    return dict(
        w=jax.random.normal(kw, (din, dout), jnp.float32) * 0.02,
        b=jax.random.normal(kb, (dout,), jnp.float32) * 0.02,
        g=jnp.ones((dout,), jnp.float32),
        beta=jnp.zeros((dout,), jnp.float32),
    )


def init_mlp(key, dims):
    keys = jax.random.split(key, len(dims) - 1)
    return [init_linear_ln(k, dims[i], dims[i + 1]) for i, k in enumerate(keys)]


def init_latent_transformation(key, embed_dims, head, rot_dims=6, trans_dims=3):
    rot_final_dim = (embed_dims // head) * (embed_dims // head) * head
    ks = jax.random.split(key, 8)
    return dict(
        rot_mlp=init_mlp(ks[0], [rot_dims, embed_dims, embed_dims, rot_final_dim]),
        trans_mlp=init_mlp(ks[1], [trans_dims, embed_dims, embed_dims, embed_dims]),
        feat_in=init_linear_ln(ks[2], embed_dims, embed_dims),
        embed_in=init_linear_ln(ks[3], embed_dims, embed_dims),
        motion_in=init_linear_ln(ks[4], embed_dims, embed_dims),
        feat_out=init_linear_ln(ks[5], embed_dims, embed_dims),
        embed_out=init_linear_ln(ks[6], embed_dims, embed_dims),
        motion_out=init_linear_ln(ks[7], embed_dims, embed_dims),
    )


# ----------------------------------------------------------------------------
# Forward
# ----------------------------------------------------------------------------
def latent_transformation_forward(
    params, prep, instances, veh2inf_rt, *, embed_dims, head,
    pc_range=(-51.2, -51.2, -5.0, 51.2, 51.2, 3.0),
    inf_pc_range=(0.0, -51.2, -5.0, 102.4, 51.2, 3.0),
):
    calib_inf2veh = jnp.linalg.inv(veh2inf_rt.T)                 # (4, 4)
    rot = calib_inf2veh[:3, :3]
    trans = calib_inf2veh[:3, 3:4]

    con_rot = rot[:, :2].reshape(1, -1)                          # (1, 6) continuous rot
    trans_v = trans.reshape(1, -1)                               # (1, 3)

    rot_para = mlp_forward(params["rot_mlp"], con_rot)           # (1, h*k*k)
    trans_para = mlp_forward(params["trans_mlp"], trans_v)       # (1, D)
    rot_mat_t = fill_tensor(rot_para, head, embed_dims).T        # (D, D) block-diag, transposed

    ref_pts, mask, idx = transform_pts(
        instances["ref_pts"], calib_inf2veh, pc_range, inf_pc_range
    )

    # queries are kept pre-stacked upstream as (3, N, D): feats / embeds / motion
    x3 = instances["queries"][:, idx]                            # single gather over 3 streams

    r_mat, vecs = build_frame_params(prep, rot_mat_t, trans_para)
    ys = fused_proj_rotate_proj(x3, prep["w_cat"], r_mat, vecs, mm_dtype=prep["mm_dtype"])

    out = dict(instances)
    out["ref_pts"] = ref_pts
    out["queries"] = ys
    out["query_feats"], out["query_embeds"], out["cache_motion_feats"] = ys[0], ys[1], ys[2]
    return out, mask


# ----------------------------------------------------------------------------
# Demo
# ----------------------------------------------------------------------------
if __name__ == "__main__":
    key = jax.random.PRNGKey(0)
    embed_dims, head = 128, 8      # small but consistent with the module structure
    num_queries = 24

    k_param, k_pts, k_q, k_big = jax.random.split(key, 4)
    params = init_latent_transformation(k_param, embed_dims, head)
    prep_bf16 = prepare_fused_params(params, use_bf16=True)   # perf path
    prep_f32 = prepare_fused_params(params, use_bf16=False)   # tight-check path

    queries = jax.random.normal(k_q, (3, num_queries, embed_dims), jnp.float32) * 0.1
    instances = {
        "ref_pts": jax.random.uniform(k_pts, (num_queries, 3), jnp.float32),
        "queries": queries,        # pre-stacked (feats, embeds, motion)
    }

    # Build veh2inf_rt so that inv(veh2inf_rt.T) is a rigid transform (small yaw + translation).
    theta = 0.1
    c, s = jnp.cos(theta), jnp.sin(theta)
    T = jnp.eye(4, dtype=jnp.float32)
    T = T.at[:3, :3].set(jnp.array([[c, -s, 0.0], [s, c, 0.0], [0.0, 0.0, 1.0]], jnp.float32))
    T = T.at[:3, 3].set(jnp.array([1.0, 2.0, 0.5], jnp.float32))
    veh2inf_rt = jnp.linalg.inv(T).T   # => calib_inf2veh == T

    # perf path: bf16 MXU operands, f32 accumulation / LN / relu
    out_bf16, mask = latent_transformation_forward(
        params, prep_bf16, instances, veh2inf_rt, embed_dims=embed_dims, head=head
    )
    jax.block_until_ready(out_bf16["queries"])

    # full-f32 path (same kernel, f32 operands) for a tight correctness check
    out_f32, _ = latent_transformation_forward(
        params, prep_f32, instances, veh2inf_rt, embed_dims=embed_dims, head=head
    )
    jax.block_until_ready(out_f32["queries"])

    # ---- plain-JAX reference (original unfolded graph, f32, HIGHEST precision) ----
    hp = jax.lax.Precision.HIGHEST
    calib = jnp.linalg.inv(veh2inf_rt.T)
    rot_mat_t_ref = fill_tensor(
        mlp_forward(params["rot_mlp"], calib[:3, :3][:, :2].reshape(1, -1)), head, embed_dims
    ).T
    trans_para_ref = mlp_forward(params["trans_mlp"], calib[:3, 3:4].reshape(1, -1))
    _, _, idx = transform_pts(
        instances["ref_pts"], calib,
        (-51.2, -51.2, -5.0, 51.2, 51.2, 3.0), (0.0, -51.2, -5.0, 102.4, 51.2, 3.0),
    )

    def _ref_ln(h, g, b, eps=1e-5):
        mu = h.mean(-1, keepdims=True)
        var = ((h - mu) ** 2).mean(-1, keepdims=True)
        return (h - mu) / jnp.sqrt(var + eps) * g + b

    def _ref_stream(x, ip, op):
        h = jnp.maximum(_ref_ln(jnp.dot(x, ip["w"], precision=hp) + ip["b"], ip["g"], ip["beta"]), 0.0)
        y = jnp.dot(h, rot_mat_t_ref, precision=hp) + trans_para_ref + x
        return jnp.maximum(_ref_ln(jnp.dot(y, op["w"], precision=hp) + op["b"], op["g"], op["beta"]), 0.0)

    in_keys = ("feat_in", "embed_in", "motion_in")
    out_keys = ("feat_out", "embed_out", "motion_out")
    ref_small = jnp.stack(
        [_ref_stream(queries[i][idx], params[ik], params[ok])
         for i, (ik, ok) in enumerate(zip(in_keys, out_keys))]
    )
    err_f32 = float(jnp.max(jnp.abs(out_f32["queries"] - ref_small)))
    assert err_f32 < 2e-3, f"f32 small-N path mismatch: max abs err {err_f32}"
    err_bf16 = float(jnp.max(jnp.abs(out_bf16["queries"] - ref_small)))
    assert err_bf16 < 1e-1, f"bf16 small-N path mismatch: max abs err {err_bf16}"

    # ---- exercise the large-N tiled path (grid=(3, 2), tile_n=512) in f32 ----
    n_big = 600
    x_big = jax.random.normal(k_big, (3, n_big, embed_dims), jnp.float32) * 0.1
    r_mat_f32, vecs_f32 = build_frame_params(prep_f32, rot_mat_t_ref, trans_para_ref)
    y_big = fused_proj_rotate_proj(
        x_big, prep_f32["w_cat"], r_mat_f32, vecs_f32, mm_dtype=prep_f32["mm_dtype"]
    )
    jax.block_until_ready(y_big)
    ref_big = jnp.stack(
        [_ref_stream(x_big[i], params[ik], params[ok])
         for i, (ik, ok) in enumerate(zip(in_keys, out_keys))]
    )
    err_big = float(jnp.max(jnp.abs(y_big - ref_big)))
    assert err_big < 2e-3, f"tiled large-N path mismatch: max abs err {err_big}"

    print("KERNEL_OK")
</pallas_src>

<mosaic_0001>
module attributes {stable_mosaic.version = 11 : i64} {
  func.func @_fused_small_kernel(%arg0: i32, %arg1: memref<3x16x128xbf16, #tpu.memory_space<vmem>>, %arg2: memref<3x128x256xbf16, #tpu.memory_space<vmem>>, %arg3: memref<3x128x128xbf16, #tpu.memory_space<vmem>>, %arg4: memref<3x8x128xf32, #tpu.memory_space<vmem>>, %arg5: memref<3x16x128xf32, #tpu.memory_space<vmem>>) attributes {dimension_semantics = [#tpu.dimension_semantics<arbitrary>], iteration_bounds = array<i64: 1>, scalar_prefetch = 0 : i64, scratch_operands = 0 : i64, tpu.core_type = #tpu.core_type<tc>, window_params = [{pipeline_mode = #tpu.pipeline_mode<synchronous>, transform_indices = @transform_0, window_bounds = array<i64: 3, 16, 128>}, {pipeline_mode = #tpu.pipeline_mode<synchronous>, transform_indices = @transform_1, window_bounds = array<i64: 3, 128, 256>}, {pipeline_mode = #tpu.pipeline_mode<synchronous>, transform_indices = @transform_2, window_bounds = array<i64: 3, 128, 128>}, {pipeline_mode = #tpu.pipeline_mode<synchronous>, transform_indices = @transform_3, window_bounds = array<i64: 3, 8, 128>}, {pipeline_mode = #tpu.pipeline_mode<synchronous>, transform_indices = @transform_4, window_bounds = array<i64: 3, 16, 128>}]} {
    %c0 = arith.constant 0 : index
    %c0_0 = arith.constant 0 : index
    %c0_1 = arith.constant 0 : index
    %0 = vector.load %arg1[%c0, %c0_0, %c0_1] : memref<3x16x128xbf16, #tpu.memory_space<vmem>>, vector<1x16x128xbf16>
    %1 = vector.shape_cast %0 : vector<1x16x128xbf16> to vector<16x128xbf16>
    %c0_2 = arith.constant 0 : index
    %c0_3 = arith.constant 0 : index
    %c0_4 = arith.constant 0 : index
    %2 = vector.load %arg2[%c0_2, %c0_3, %c0_4] : memref<3x128x256xbf16, #tpu.memory_space<vmem>>, vector<1x128x256xbf16>
    %3 = vector.shape_cast %2 : vector<1x128x256xbf16> to vector<128x256xbf16>
    %c0_5 = arith.constant 0 : index
    %c0_6 = arith.constant 0 : index
    %c0_7 = arith.constant 0 : index
    %4 = vector.load %arg3[%c0_5, %c0_6, %c0_7] : memref<3x128x128xbf16, #tpu.memory_space<vmem>>, vector<1x128x128xbf16>
    %5 = vector.shape_cast %4 : vector<1x128x128xbf16> to vector<128x128xbf16>
    %c0_8 = arith.constant 0 : index
    %c0_9 = arith.constant 0 : index
    %c0_10 = arith.constant 0 : index
    %6 = vector.load %arg4[%c0_8, %c0_9, %c0_10] : memref<3x8x128xf32, #tpu.memory_space<vmem>>, vector<1x8x128xf32>
    %7 = vector.shape_cast %6 : vector<1x8x128xf32> to vector<8x128xf32>
    %cst = arith.constant dense<0.000000e+00> : vector<16x256xf32>
    %8 = tpu.matmul %1, %3, %cst {dimension_numbers = #tpu.dot_dimension_numbers<[1], [0], [0], [1], [0, 0, 1, 1], [], []>} : vector<16x128xbf16>, vector<128x256xbf16>, vector<16x256xf32> -> vector<16x256xf32>
    %9 = vector.extract_strided_slice %7 {offsets = [0, 0], sizes = [1, 128], strides = [1, 1]} : vector<8x128xf32> to vector<1x128xf32>
    %10 = vector.extract_strided_slice %7 {offsets = [1, 0], sizes = [1, 128], strides = [1, 1]} : vector<8x128xf32> to vector<1x128xf32>
    %11 = vector.extract_strided_slice %7 {offsets = [2, 0], sizes = [1, 128], strides = [1, 1]} : vector<8x128xf32> to vector<1x128xf32>
    %12 = vector.extract_strided_slice %7 {offsets = [3, 0], sizes = [1, 128], strides = [1, 1]} : vector<8x128xf32> to vector<1x128xf32>
    %13 = vector.extract_strided_slice %7 {offsets = [4, 0], sizes = [1, 128], strides = [1, 1]} : vector<8x128xf32> to vector<1x128xf32>
    %14 = vector.extract_strided_slice %7 {offsets = [5, 0], sizes = [1, 128], strides = [1, 1]} : vector<8x128xf32> to vector<1x128xf32>
    %15 = vector.extract_strided_slice %8 {offsets = [0, 0], sizes = [16, 128], strides = [1, 1]} : vector<16x256xf32> to vector<16x128xf32>
    %16 = vector.broadcast %9 : vector<1x128xf32> to vector<16x128xf32>
    %17 = arith.addf %15, %16 : vector<16x128xf32>
    %cst_11 = arith.constant dense<0.000000e+00> : vector<16xf32>
    %18 = vector.multi_reduction <add>, %17, %cst_11 [1] : vector<16x128xf32> to vector<16xf32>
    %19 = vector.shape_cast %18 : vector<16xf32> to vector<16x1xf32>
    %cst_12 = arith.constant 1.280000e+02 : f32
    %20 = vector.broadcast %cst_12 : f32 to vector<16x1xf32>
    %21 = arith.divf %19, %20 : vector<16x1xf32>
    %22 = vector.broadcast %21 : vector<16x1xf32> to vector<16x128xf32>
    %23 = arith.subf %17, %22 : vector<16x128xf32>
    %24 = arith.mulf %23, %23 : vector<16x128xf32>
    %cst_13 = arith.constant dense<0.000000e+00> : vector<16xf32>
    %25 = vector.multi_reduction <add>, %24, %cst_13 [1] : vector<16x128xf32> to vector<16xf32>
    %26 = vector.shape_cast %25 : vector<16xf32> to vector<16x1xf32>
    %cst_14 = arith.constant 1.280000e+02 : f32
    %27 = vector.broadcast %cst_14 : f32 to vector<16x1xf32>
    %28 = arith.divf %26, %27 : vector<16x1xf32>
    %cst_15 = arith.constant 9.99999974E-6 : f32
    %29 = vector.broadcast %cst_15 : f32 to vector<16x1xf32>
    %30 = arith.addf %28, %29 : vector<16x1xf32>
    %31 = math.rsqrt %30 : vector<16x1xf32>
    %32 = vector.broadcast %31 : vector<16x1xf32> to vector<16x128xf32>
    %33 = arith.mulf %23, %32 : vector<16x128xf32>
    %34 = vector.broadcast %10 : vector<1x128xf32> to vector<16x128xf32>
    %35 = arith.mulf %33, %34 : vector<16x128xf32>
    %36 = vector.broadcast %11 : vector<1x128xf32> to vector<16x128xf32>
    %37 = arith.addf %35, %36 : vector<16x128xf32>
    %cst_16 = arith.constant 0.000000e+00 : f32
    %38 = vector.broadcast %cst_16 : f32 to vector<16x128xf32>
    %39 = arith.maximumf %37, %38 : vector<16x128xf32>
    %40 = arith.truncf %39 : vector<16x128xf32> to vector<16x128xbf16>
    %cst_17 = arith.constant dense<0.000000e+00> : vector<16x128xf32>
    %41 = tpu.matmul %40, %5, %cst_17 {dimension_numbers = #tpu.dot_dimension_numbers<[1], [0], [0], [1], [0, 0, 1, 1], [], []>} : vector<16x128xbf16>, vector<128x128xbf16>, vector<16x128xf32> -> vector<16x128xf32>
    %42 = vector.extract_strided_slice %8 {offsets = [0, 128], sizes = [16, 128], strides = [1, 1]} : vector<16x256xf32> to vector<16x128xf32>
    %43 = arith.addf %41, %42 : vector<16x128xf32>
    %44 = vector.broadcast %12 : vector<1x128xf32> to vector<16x128xf32>
    %45 = arith.addf %43, %44 : vector<16x128xf32>
    %cst_18 = arith.constant dense<0.000000e+00> : vector<16xf32>
    %46 = vector.multi_reduction <add>, %45, %cst_18 [1] : vector<16x128xf32> to vector<16xf32>
    %47 = vector.shape_cast %46 : vector<16xf32> to vector<16x1xf32>
    %cst_19 = arith.constant 1.280000e+02 : f32
    %48 = vector.broadcast %cst_19 : f32 to vector<16x1xf32>
    %49 = arith.divf %47, %48 : vector<16x1xf32>
    %50 = vector.broadcast %49 : vector<16x1xf32> to vector<16x128xf32>
    %51 = arith.subf %45, %50 : vector<16x128xf32>
    %52 = arith.mulf %51, %51 : vector<16x128xf32>
    %cst_20 = arith.constant dense<0.000000e+00> : vector<16xf32>
    %53 = vector.multi_reduction <add>, %52, %cst_20 [1] : vector<16x128xf32> to vector<16xf32>
    %54 = vector.shape_cast %53 : vector<16xf32> to vector<16x1xf32>
    %cst_21 = arith.constant 1.280000e+02 : f32
    %55 = vector.broadcast %cst_21 : f32 to vector<16x1xf32>
    %56 = arith.divf %54, %55 : vector<16x1xf32>
    %cst_22 = arith.constant 9.99999974E-6 : f32
    %57 = vector.broadcast %cst_22 : f32 to vector<16x1xf32>
    %58 = arith.addf %56, %57 : vector<16x1xf32>
    %59 = math.rsqrt %58 : vector<16x1xf32>
    %60 = vector.broadcast %59 : vector<16x1xf32> to vector<16x128xf32>
    %61 = arith.mulf %51, %60 : vector<16x128xf32>
    %62 = vector.broadcast %13 : vector<1x128xf32> to vector<16x128xf32>
    %63 = arith.mulf %61, %62 : vector<16x128xf32>
    %64 = vector.broadcast %14 : vector<1x128xf32> to vector<16x128xf32>
    %65 = arith.addf %63, %64 : vector<16x128xf32>
    %cst_23 = arith.constant 0.000000e+00 : f32
    %66 = vector.broadcast %cst_23 : f32 to vector<16x128xf32>
    %67 = arith.maximumf %65, %66 : vector<16x128xf32>
    %c0_24 = arith.constant 0 : index
    %c0_25 = arith.constant 0 : index
    %c0_26 = arith.constant 0 : index
    %68 = vector.load %arg5[%c0_24, %c0_25, %c0_26] : memref<3x16x128xf32, #tpu.memory_space<vmem>>, vector<1x16x128xf32>
    %69 = vector.shape_cast %68 : vector<1x16x128xf32> to vector<16x128xf32>
    %70 = vector.shape_cast %67 : vector<16x128xf32> to vector<1x16x128xf32>
    tpu.vector_store %arg5[%c0_24, %c0_25, %c0_26], %70 {strides = array<i32>} : memref<3x16x128xf32, #tpu.memory_space<vmem>>, vector<1x16x128xf32>,
    %c1 = arith.constant 1 : index
    %c0_27 = arith.constant 0 : index
    %c0_28 = arith.constant 0 : index
    %71 = vector.load %arg1[%c1, %c0_27, %c0_28] : memref<3x16x128xbf16, #tpu.memory_space<vmem>>, vector<1x16x128xbf16>
    %72 = vector.shape_cast %71 : vector<1x16x128xbf16> to vector<16x128xbf16>
    %c1_29 = arith.constant 1 : index
    %c0_30 = arith.constant 0 : index
    %c0_31 = arith.constant 0 : index
    %73 = vector.load %arg2[%c1_29, %c0_30, %c0_31] : memref<3x128x256xbf16, #tpu.memory_space<vmem>>, vector<1x128x256xbf16>
    %74 = vector.shape_cast %73 : vector<1x128x256xbf16> to vector<128x256xbf16>
    %c1_32 = arith.constant 1 : index
    %c0_33 = arith.constant 0 : index
    %c0_34 = arith.constant 0 : index
    %75 = vector.load %arg3[%c1_32, %c0_33, %c0_34] : memref<3x128x128xbf16, #tpu.memory_space<vmem>>, vector<1x128x128xbf16>
    %76 = vector.shape_cast %75 : vector<1x128x128xbf16> to vector<128x128xbf16>
    %c1_35 = arith.constant 1 : index
    %c0_36 = arith.constant 0 : index
    %c0_37 = arith.constant 0 : index
    %77 = vector.load %arg4[%c1_35, %c0_36, %c0_37] : memref<3x8x128xf32, #tpu.memory_space<vmem>>, vector<1x8x128xf32>
    %78 = vector.shape_cast %77 : vector<1x8x128xf32> to vector<8x128xf32>
    %cst_38 = arith.constant dense<0.000000e+00> : vector<16x256xf32>
    %79 = tpu.matmul %72, %74, %cst_38 {dimension_numbers = #tpu.dot_dimension_numbers<[1], [0], [0], [1], [0, 0, 1, 1], [], []>} : vector<16x128xbf16>, vector<128x256xbf16>, vector<16x256xf32> -> vector<16x256xf32>
    %80 = vector.extract_strided_slice %78 {offsets = [0, 0], sizes = [1, 128], strides = [1, 1]} : vector<8x128xf32> to vector<1x128xf32>
    %81 = vector.extract_strided_slice %78 {offsets = [1, 0], sizes = [1, 128], strides = [1, 1]} : vector<8x128xf32> to vector<1x128xf32>
    %82 = vector.extract_strided_slice %78 {offsets = [2, 0], sizes = [1, 128], strides = [1, 1]} : vector<8x128xf32> to vector<1x128xf32>
    %83 = vector.extract_strided_slice %78 {offsets = [3, 0], sizes = [1, 128], strides = [1, 1]} : vector<8x128xf32> to vector<1x128xf32>
    %84 = vector.extract_strided_slice %78 {offsets = [4, 0], sizes = [1, 128], strides = [1, 1]} : vector<8x128xf32> to vector<1x128xf32>
    %85 = vector.extract_strided_slice %78 {offsets = [5, 0], sizes = [1, 128], strides = [1, 1]} : vector<8x128xf32> to vector<1x128xf32>
    %86 = vector.extract_strided_slice %79 {offsets = [0, 0], sizes = [16, 128], strides = [1, 1]} : vector<16x256xf32> to vector<16x128xf32>
    %87 = vector.broadcast %80 : vector<1x128xf32> to vector<16x128xf32>
    %88 = arith.addf %86, %87 : vector<16x128xf32>
    %cst_39 = arith.constant dense<0.000000e+00> : vector<16xf32>
    %89 = vector.multi_reduction <add>, %88, %cst_39 [1] : vector<16x128xf32> to vector<16xf32>
    %90 = vector.shape_cast %89 : vector<16xf32> to vector<16x1xf32>
    %cst_40 = arith.constant 1.280000e+02 : f32
    %91 = vector.broadcast %cst_40 : f32 to vector<16x1xf32>
    %92 = arith.divf %90, %91 : vector<16x1xf32>
    %93 = vector.broadcast %92 : vector<16x1xf32> to vector<16x128xf32>
    %94 = arith.subf %88, %93 : vector<16x128xf32>
    %95 = arith.mulf %94, %94 : vector<16x128xf32>
    %cst_41 = arith.constant dense<0.000000e+00> : vector<16xf32>
    %96 = vector.multi_reduction <add>, %95, %cst_41 [1] : vector<16x128xf32> to vector<16xf32>
    %97 = vector.shape_cast %96 : vector<16xf32> to vector<16x1xf32>
    %cst_42 = arith.constant 1.280000e+02 : f32
    %98 = vector.broadcast %cst_42 : f32 to vector<16x1xf32>
    %99 = arith.divf %97, %98 : vector<16x1xf32>
    %cst_43 = arith.constant 9.99999974E-6 : f32
    %100 = vector.broadcast %cst_43 : f32 to vector<16x1xf32>
    %101 = arith.addf %99, %100 : vector<16x1xf32>
    %102 = math.rsqrt %101 : vector<16x1xf32>
    %103 = vector.broadcast %102 : vector<16x1xf32> to vector<16x128xf32>
    %104 = arith.mulf %94, %103 : vector<16x128xf32>
    %105 = vector.broadcast %81 : vector<1x128xf32> to vector<16x128xf32>
    %106 = arith.mulf %104, %105 : vector<16x128xf32>
    %107 = vector.broadcast %82 : vector<1x128xf32> to vector<16x128xf32>
    %108 = arith.addf %106, %107 : vector<16x128xf32>
    %cst_44 = arith.constant 0.000000e+00 : f32
    %109 = vector.broadcast %cst_44 : f32 to vector<16x128xf32>
    %110 = arith.maximumf %108, %109 : vector<16x128xf32>
    %111 = arith.truncf %110 : vector<16x128xf32> to vector<16x128xbf16>
    %cst_45 = arith.constant dense<0.000000e+00> : vector<16x128xf32>
    %112 = tpu.matmul %111, %76, %cst_45 {dimension_numbers = #tpu.dot_dimension_numbers<[1], [0], [0], [1], [0, 0, 1, 1], [], []>} : vector<16x128xbf16>, vector<128x128xbf16>, vector<16x128xf32> -> vector<16x128xf32>
    %113 = vector.extract_strided_slice %79 {offsets = [0, 128], sizes = [16, 128], strides = [1, 1]} : vector<16x256xf32> to vector<16x128xf32>
    %114 = arith.addf %112, %113 : vector<16x128xf32>
    %115 = vector.broadcast %83 : vector<1x128xf32> to vector<16x128xf32>
    %116 = arith.addf %114, %115 : vector<16x128xf32>
    %cst_46 = arith.constant dense<0.000000e+00> : vector<16xf32>
    %117 = vector.multi_reduction <add>, %116, %cst_46 [1] : vector<16x128xf32> to vector<16xf32>
    %118 = vector.shape_cast %117 : vector<16xf32> to vector<16x1xf32>
    %cst_47 = arith.constant 1.280000e+02 : f32
    %119 = vector.broadcast %cst_47 : f32 to vector<16x1xf32>
    %120 = arith.divf %118, %119 : vector<16x1xf32>
    %121 = vector.broadcast %120 : vector<16x1xf32> to vector<16x128xf32>
    %122 = arith.subf %116, %121 : vector<16x128xf32>
    %123 = arith.mulf %122, %122 : vector<16x128xf32>
    %cst_48 = arith.constant dense<0.000000e+00> : vector<16xf32>
    %124 = vector.multi_reduction <add>, %123, %cst_48 [1] : vector<16x128xf32> to vector<16xf32>
    %125 = vector.shape_cast %124 : vector<16xf32> to vector<16x1xf32>
    %cst_49 = arith.constant 1.280000e+02 : f32
    %126 = vector.broadcast %cst_49 : f32 to vector<16x1xf32>
    %127 = arith.divf %125, %126 : vector<16x1xf32>
    %cst_50 = arith.constant 9.99999974E-6 : f32
    %128 = vector.broadcast %cst_50 : f32 to vector<16x1xf32>
    %129 = arith.addf %127, %128 : vector<16x1xf32>
    %130 = math.rsqrt %129 : vector<16x1xf32>
    %131 = vector.broadcast %130 : vector<16x1xf32> to vector<16x128xf32>
    %132 = arith.mulf %122, %131 : vector<16x128xf32>
    %133 = vector.broadcast %84 : vector<1x128xf32> to vector<16x128xf32>
    %134 = arith.mulf %132, %133 : vector<16x128xf32>
    %135 = vector.broadcast %85 : vector<1x128xf32> to vector<16x128xf32>
    %136 = arith.addf %134, %135 : vector<16x128xf32>
    %cst_51 = arith.constant 0.000000e+00 : f32
    %137 = vector.broadcast %cst_51 : f32 to vector<16x128xf32>
    %138 = arith.maximumf %136, %137 : vector<16x128xf32>
    %c1_52 = arith.constant 1 : index
    %c0_53 = arith.constant 0 : index
    %c0_54 = arith.constant 0 : index
    %139 = vector.load %arg5[%c1_52, %c0_53, %c0_54] : memref<3x16x128xf32, #tpu.memory_space<vmem>>, vector<1x16x128xf32>
    %140 = vector.shape_cast %139 : vector<1x16x128xf32> to vector<16x128xf32>
    %141 = vector.shape_cast %138 : vector<16x128xf32> to vector<1x16x128xf32>
    tpu.vector_store %arg5[%c1_52, %c0_53, %c0_54], %141 {strides = array<i32>} : memref<3x16x128xf32, #tpu.memory_space<vmem>>, vector<1x16x128xf32>,
    %c2 = arith.constant 2 : index
    %c0_55 = arith.constant 0 : index
    %c0_56 = arith.constant 0 : index
    %142 = vector.load %arg1[%c2, %c0_55, %c0_56] : memref<3x16x128xbf16, #tpu.memory_space<vmem>>, vector<1x16x128xbf16>
    %143 = vector.shape_cast %142 : vector<1x16x128xbf16> to vector<16x128xbf16>
    %c2_57 = arith.constant 2 : index
    %c0_58 = arith.constant 0 : index
    %c0_59 = arith.constant 0 : index
    %144 = vector.load %arg2[%c2_57, %c0_58, %c0_59] : memref<3x128x256xbf16, #tpu.memory_space<vmem>>, vector<1x128x256xbf16>
    %145 = vector.shape_cast %144 : vector<1x128x256xbf16> to vector<128x256xbf16>
    %c2_60 = arith.constant 2 : index
    %c0_61 = arith.constant 0 : index
    %c0_62 = arith.constant 0 : index
    %146 = vector.load %arg3[%c2_60, %c0_61, %c0_62] : memref<3x128x128xbf16, #tpu.memory_space<vmem>>, vector<1x128x128xbf16>
    %147 = vector.shape_cast %146 : vector<1x128x128xbf16> to vector<128x128xbf16>
    %c2_63 = arith.constant 2 : index
    %c0_64 = arith.constant 0 : index
    %c0_65 = arith.constant 0 : index
    %148 = vector.load %arg4[%c2_63, %c0_64, %c0_65] : memref<3x8x128xf32, #tpu.memory_space<vmem>>, vector<1x8x128xf32>
    %149 = vector.shape_cast %148 : vector<1x8x128xf32> to vector<8x128xf32>
    %cst_66 = arith.constant dense<0.000000e+00> : vector<16x256xf32>
    %150 = tpu.matmul %143, %145, %cst_66 {dimension_numbers = #tpu.dot_dimension_numbers<[1], [0], [0], [1], [0, 0, 1, 1], [], []>} : vector<16x128xbf16>, vector<128x256xbf16>, vector<16x256xf32> -> vector<16x256xf32>
    %151 = vector.extract_strided_slice %149 {offsets = [0, 0], sizes = [1, 128], strides = [1, 1]} : vector<8x128xf32> to vector<1x128xf32>
    %152 = vector.extract_strided_slice %149 {offsets = [1, 0], sizes = [1, 128], strides = [1, 1]} : vector<8x128xf32> to vector<1x128xf32>
    %153 = vector.extract_strided_slice %149 {offsets = [2, 0], sizes = [1, 128], strides = [1, 1]} : vector<8x128xf32> to vector<1x128xf32>
    %154 = vector.extract_strided_slice %149 {offsets = [3, 0], sizes = [1, 128], strides = [1, 1]} : vector<8x128xf32> to vector<1x128xf32>
    %155 = vector.extract_strided_slice %149 {offsets = [4, 0], sizes = [1, 128], strides = [1, 1]} : vector<8x128xf32> to vector<1x128xf32>
    %156 = vector.extract_strided_slice %149 {offsets = [5, 0], sizes = [1, 128], strides = [1, 1]} : vector<8x128xf32> to vector<1x128xf32>
    %157 = vector.extract_strided_slice %150 {offsets = [0, 0], sizes = [16, 128], strides = [1, 1]} : vector<16x256xf32> to vector<16x128xf32>
    %158 = vector.broadcast %151 : vector<1x128xf32> to vector<16x128xf32>
    %159 = arith.addf %157, %158 : vector<16x128xf32>
    %cst_67 = arith.constant dense<0.000000e+00> : vector<16xf32>
    %160 = vector.multi_reduction <add>, %159, %cst_67 [1] : vector<16x128xf32> to vector<16xf32>
    %161 = vector.shape_cast %160 : vector<16xf32> to vector<16x1xf32>
    %cst_68 = arith.constant 1.280000e+02 : f32
    %162 = vector.broadcast %cst_68 : f32 to vector<16x1xf32>
    %163 = arith.divf %161, %162 : vector<16x1xf32>
    %164 = vector.broadcast %163 : vector<16x1xf32> to vector<16x128xf32>
    %165 = arith.subf %159, %164 : vector<16x128xf32>
    %166 = arith.mulf %165, %165 : vector<16x128xf32>
    %cst_69 = arith.constant dense<0.000000e+00> : vector<16xf32>
    %167 = vector.multi_reduction <add>, %166, %cst_69 [1] : vector<16x128xf32> to vector<16xf32>
    %168 = vector.shape_cast %167 : vector<16xf32> to vector<16x1xf32>
    %cst_70 = arith.constant 1.280000e+02 : f32
    %169 = vector.broadcast %cst_70 : f32 to vector<16x1xf32>
    %170 = arith.divf %168, %169 : vector<16x1xf32>
    %cst_71 = arith.constant 9.99999974E-6 : f32
    %171 = vector.broadcast %cst_71 : f32 to vector<16x1xf32>
    %172 = arith.addf %170, %171 : vector<16x1xf32>
    %173 = math.rsqrt %172 : vector<16x1xf32>
    %174 = vector.broadcast %173 : vector<16x1xf32> to vector<16x128xf32>
    %175 = arith.mulf %165, %174 : vector<16x128xf32>
    %176 = vector.broadcast %152 : vector<1x128xf32> to vector<16x128xf32>
    %177 = arith.mulf %175, %176 : vector<16x128xf32>
    %178 = vector.broadcast %153 : vector<1x128xf32> to vector<16x128xf32>
    %179 = arith.addf %177, %178 : vector<16x128xf32>
    %cst_72 = arith.constant 0.000000e+00 : f32
    %180 = vector.broadcast %cst_72 : f32 to vector<16x128xf32>
    %181 = arith.maximumf %179, %180 : vector<16x128xf32>
    %182 = arith.truncf %181 : vector<16x128xf32> to vector<16x128xbf16>
    %cst_73 = arith.constant dense<0.000000e+00> : vector<16x128xf32>
    %183 = tpu.matmul %182, %147, %cst_73 {dimension_numbers = #tpu.dot_dimension_numbers<[1], [0], [0], [1], [0, 0, 1, 1], [], []>} : vector<16x128xbf16>, vector<128x128xbf16>, vector<16x128xf32> -> vector<16x128xf32>
    %184 = vector.extract_strided_slice %150 {offsets = [0, 128], sizes = [16, 128], strides = [1, 1]} : vector<16x256xf32> to vector<16x128xf32>
    %185 = arith.addf %183, %184 : vector<16x128xf32>
    %186 = vector.broadcast %154 : vector<1x128xf32> to vector<16x128xf32>
    %187 = arith.addf %185, %186 : vector<16x128xf32>
    %cst_74 = arith.constant dense<0.000000e+00> : vector<16xf32>
    %188 = vector.multi_reduction <add>, %187, %cst_74 [1] : vector<16x128xf32> to vector<16xf32>
    %189 = vector.shape_cast %188 : vector<16xf32> to vector<16x1xf32>
    %cst_75 = arith.constant 1.280000e+02 : f32
    %190 = vector.broadcast %cst_75 : f32 to vector<16x1xf32>
    %191 = arith.divf %189, %190 : vector<16x1xf32>
    %192 = vector.broadcast %191 : vector<16x1xf32> to vector<16x128xf32>
    %193 = arith.subf %187, %192 : vector<16x128xf32>
    %194 = arith.mulf %193, %193 : vector<16x128xf32>
    %cst_76 = arith.constant dense<0.000000e+00> : vector<16xf32>
    %195 = vector.multi_reduction <add>, %194, %cst_76 [1] : vector<16x128xf32> to vector<16xf32>
    %196 = vector.shape_cast %195 : vector<16xf32> to vector<16x1xf32>
    %cst_77 = arith.constant 1.280000e+02 : f32
    %197 = vector.broadcast %cst_77 : f32 to vector<16x1xf32>
    %198 = arith.divf %196, %197 : vector<16x1xf32>
    %cst_78 = arith.constant 9.99999974E-6 : f32
    %199 = vector.broadcast %cst_78 : f32 to vector<16x1xf32>
    %200 = arith.addf %198, %199 : vector<16x1xf32>
    %201 = math.rsqrt %200 : vector<16x1xf32>
    %202 = vector.broadcast %201 : vector<16x1xf32> to vector<16x128xf32>
    %203 = arith.mulf %193, %202 : vector<16x128xf32>
    %204 = vector.broadcast %155 : vector<1x128xf32> to vector<16x128xf32>
    %205 = arith.mulf %203, %204 : vector<16x128xf32>
    %206 = vector.broadcast %156 : vector<1x128xf32> to vector<16x128xf32>
    %207 = arith.addf %205, %206 : vector<16x128xf32>
    %cst_79 = arith.constant 0.000000e+00 : f32
    %208 = vector.broadcast %cst_79 : f32 to vector<16x128xf32>
    %209 = arith.maximumf %207, %208 : vector<16x128xf32>
    %c2_80 = arith.constant 2 : index
    %c0_81 = arith.constant 0 : index
    %c0_82 = arith.constant 0 : index
    %210 = vector.load %arg5[%c2_80, %c0_81, %c0_82] : memref<3x16x128xf32, #tpu.memory_space<vmem>>, vector<1x16x128xf32>
    %211 = vector.shape_cast %210 : vector<1x16x128xf32> to vector<16x128xf32>
    %212 = vector.shape_cast %209 : vector<16x128xf32> to vector<1x16x128xf32>
    tpu.vector_store %arg5[%c2_80, %c0_81, %c0_82], %212 {strides = array<i32>} : memref<3x16x128xf32, #tpu.memory_space<vmem>>, vector<1x16x128xf32>,
    return
  }
  func.func @transform_0(%arg0: i32) -> (i32, i32, i32) {
    %c0_i32 = arith.constant 0 : i32
    %c0_i32_0 = arith.constant 0 : i32
    %c0_i32_1 = arith.constant 0 : i32
    %c0_i32_2 = arith.constant 0 : i32
    return %c0_i32, %c0_i32_0, %c0_i32_1 : i32, i32, i32
  }
  func.func @transform_1(%arg0: i32) -> (i32, i32, i32) {
    %c0_i32 = arith.constant 0 : i32
    %c0_i32_0 = arith.constant 0 : i32
    %c0_i32_1 = arith.constant 0 : i32
    %c0_i32_2 = arith.constant 0 : i32
    return %c0_i32, %c0_i32_0, %c0_i32_1 : i32, i32, i32
  }
  func.func @transform_2(%arg0: i32) -> (i32, i32, i32) {
    %c0_i32 = arith.constant 0 : i32
    %c0_i32_0 = arith.constant 0 : i32
    %c0_i32_1 = arith.constant 0 : i32
    %c0_i32_2 = arith.constant 0 : i32
    return %c0_i32, %c0_i32_0, %c0_i32_1 : i32, i32, i32
  }
  func.func @transform_3(%arg0: i32) -> (i32, i32, i32) {
    %c0_i32 = arith.constant 0 : i32
    %c0_i32_0 = arith.constant 0 : i32
    %c0_i32_1 = arith.constant 0 : i32
    %c0_i32_2 = arith.constant 0 : i32
    return %c0_i32, %c0_i32_0, %c0_i32_1 : i32, i32, i32
  }
  func.func @transform_4(%arg0: i32) -> (i32, i32, i32) {
    %c0_i32 = arith.constant 0 : i32
    %c0_i32_0 = arith.constant 0 : i32
    %c0_i32_1 = arith.constant 0 : i32
    %c0_i32_2 = arith.constant 0 : i32
    return %c0_i32, %c0_i32_0, %c0_i32_1 : i32, i32, i32
  }
}

</mosaic_0001>

<llo_original>
// kernel: tpu_custom_call.1
$region0: #{tpu_custom_call.1}
  #allocation0 [shape = 'u32[]', space=smem, size = 0x4, offset = 0x4, fixed_abs, tag = 'smem constant byte address 0x4 - core index']
  #allocation1 [shape = 'u32[144,128]{1,0:T(1,128)}', space=vmem, size = 0x12000, scoped, tag = 'internal scratch']
  %s0 = inlined_call_operand.hbm [shape: bf16[3,16,128], index: 0, kind: input, shape index: {}]
  %s1 = inlined_call_operand.hbm [shape: bf16[3,128,256], index: 1, kind: input, shape index: {}]
  %s2 = inlined_call_operand.hbm [shape: bf16[3,128,128], index: 2, kind: input, shape index: {}]
  %s3 = inlined_call_operand.hbm [shape: f32[3,8,128], index: 3, kind: input, shape index: {}]
  %s4 = inlined_call_operand.hbm [shape: f32[3,16,128], index: 4, kind: output, shape index: {}]
  %s5 = sld [smem:[#allocation0]]
  $region42: #{tpu_custom_call.1} parent=0
    _
  %s7 = ssub.s32 1, %s5
  %s8 = scalar_select 0, %s7, %s5
  $region1: #{tpu_custom_call.1} parent=0
    #allocation2 [shape = 'u8[12288]{0}', space=vmem, size = 0x3000, scoped, tag = 'input window, operand 0, single buffered']
    #allocation3 [shape = 's32[1]{0}', space=sflag, size = 0x4, scoped, tag = 'scoped memory for tpu_custom_call.1']
    #allocation4 [shape = 's32[1]{0}', space=sflag, size = 0x4, scoped, tag = 'scoped memory for tpu_custom_call.1']
    #allocation5 [shape = 'u8[196608]{0}', space=vmem, size = 0x30000, scoped, tag = 'input window, operand 1, single buffered']
    #allocation6 [shape = 's32[1]{0}', space=sflag, size = 0x4, scoped, tag = 'scoped memory for tpu_custom_call.1']
    #allocation7 [shape = 'u8[98304]{0}', space=vmem, size = 0x18000, scoped, tag = 'input window, operand 2, single buffered']
    #allocation8 [shape = 'u8[12288]{0}', space=vmem, size = 0x3000, scoped, tag = 'input window, operand 3, single buffered']
    #allocation9 [shape = 's32[1]{0}', space=sflag, size = 0x4, scoped, tag = 'scoped memory for tpu_custom_call.1']
    #allocation10 [shape = 'u8[24576]{0}', space=vmem, size = 0x6000, scoped, tag = 'output window, operand 0, single buffered']
    %9 = vsyncpa [#allocation3], 0
    %10 = vsyncpa [#allocation6], 0
    %11 = vsyncpa [#allocation9], 0
    %12 = vsyncpa [#allocation4], 0
    // Predicated region
    $region2: #{tpu_custom_call.1} parent=1 // pred_check
      _
    $region3: #{tpu_custom_call.1} parent=1 // pred_check_branch
      %14 = sbr.rel (0) target = $region5
    $region4: #{tpu_custom_call.1} parent=1 // pred_region
      %s16 = ssub.s32 384, 384
      %17 = vsyncadd [#allocation3], %s16
      %s18 = sshll.u32 [#allocation2], 4
      %s19 = int_to_ptr.vmem [resolvable:$true] %s18
      %24 = dma.hbm_to_vmem [thread:$0]  %s0, 384, %s19, [#allocation3], 64, 64, 4
    $region5: #{tpu_custom_call.1} parent=1 // pred_fallthru
      _
    // Predicated region
    $region6: #{tpu_custom_call.1} parent=1 // pred_check
      _
    $region7: #{tpu_custom_call.1} parent=1 // pred_check_branch
      %26 = sbr.rel (0) target = $region9
    $region8: #{tpu_custom_call.1} parent=1 // pred_region
      %s28 = ssub.s32 6144, 6144
      %29 = vsyncadd [#allocation6], %s28
      %s30 = sshll.u32 [#allocation5], 4
      %s31 = int_to_ptr.vmem [resolvable:$true] %s30
      %36 = dma.hbm_to_vmem [thread:$0]  %s1, 6144, %s31, [#allocation6], 128, 128, 8
    $region9: #{tpu_custom_call.1} parent=1 // pred_fallthru
      _
    // Predicated region
    $region10: #{tpu_custom_call.1} parent=1 // pred_check
      _
    $region11: #{tpu_custom_call.1} parent=1 // pred_check_branch
      %38 = sbr.rel (0) target = $region13
    $region12: #{tpu_custom_call.1} parent=1 // pred_region
      %s40 = ssub.s32 3072, 3072
      %41 = vsyncadd [#allocation6], %s40
      %s42 = sshll.u32 [#allocation7], 4
      %s43 = int_to_ptr.vmem [resolvable:$true] %s42
      %48 = dma.hbm_to_vmem [thread:$0]  %s2, 3072, %s43, [#allocation6], 64, 64, 4
    $region13: #{tpu_custom_call.1} parent=1 // pred_fallthru
      _
    // Predicated region
    $region14: #{tpu_custom_call.1} parent=1 // pred_check
      _
    $region15: #{tpu_custom_call.1} parent=1 // pred_check_branch
      %50 = sbr.rel (0) target = $region17
    $region16: #{tpu_custom_call.1} parent=1 // pred_region
      %s52 = ssub.s32 384, 384
      %53 = vsyncadd [#allocation9], %s52
      %s54 = sshll.u32 [#allocation8], 4
      %s55 = int_to_ptr.vmem [resolvable:$true] %s54
      %60 = dma.hbm_to_vmem [thread:$0]  %s3, 384, %s55, [#allocation9], 128, 128, 8
    $region17: #{tpu_custom_call.1} parent=1 // pred_fallthru
      _
    // Predicated region
    $region18: #{tpu_custom_call.1} parent=1 // pred_check
      _
    $region19: #{tpu_custom_call.1} parent=1 // pred_check_branch
      %62 = sbr.rel (0) target = $region21
    $region20: #{tpu_custom_call.1} parent=1 // pred_region
      %63 = dma.done [#allocation3], 384
    $region21: #{tpu_custom_call.1} parent=1 // pred_fallthru
      _
    // Predicated region
    $region22: #{tpu_custom_call.1} parent=1 // pred_check
      _
    $region23: #{tpu_custom_call.1} parent=1 // pred_check_branch
      %65 = sbr.rel (0) target = $region25
    $region24: #{tpu_custom_call.1} parent=1 // pred_region
      %66 = dma.done [#allocation6], 6144
    $region25: #{tpu_custom_call.1} parent=1 // pred_fallthru
      _
    // Predicated region
    $region26: #{tpu_custom_call.1} parent=1 // pred_check
      _
    $region27: #{tpu_custom_call.1} parent=1 // pred_check_branch
      %68 = sbr.rel (0) target = $region29
    $region28: #{tpu_custom_call.1} parent=1 // pred_region
      %69 = dma.done [#allocation6], 3072
    $region29: #{tpu_custom_call.1} parent=1 // pred_fallthru
      _
    // Predicated region
    $region30: #{tpu_custom_call.1} parent=1 // pred_check
      _
    $region31: #{tpu_custom_call.1} parent=1 // pred_check_branch
      %71 = sbr.rel (0) target = $region33
    $region32: #{tpu_custom_call.1} parent=1 // pred_region
      %72 = dma.done [#allocation9], 384
    $region33: #{tpu_custom_call.1} parent=1 // pred_fallthru
      _
    %v74 = vld [vmem:[#allocation2] sm:$0xf]
    %v75 = vld [vmem:[#allocation2 + $0x4] sm:$0xf]
    %v76 = vld [vmem:[#allocation5] sm:$0xff]
    %v77 = vld [vmem:[#allocation5 + $0x8] sm:$0xff]
    %v78 = vld [vmem:[#allocation5 + $0x10] sm:$0xff]
    %v79 = vld [vmem:[#allocation5 + $0x18] sm:$0xff]
    %v80 = vld [vmem:[#allocation5 + $0x20] sm:$0xff]
    %v81 = vld [vmem:[#allocation5 + $0x28] sm:$0xff]
    %v82 = vld [vmem:[#allocation5 + $0x30] sm:$0xff]
    %v83 = vld [vmem:[#allocation5 + $0x38] sm:$0xff]
    %v84 = vld [vmem:[#allocation5 + $0x40] sm:$0xff]
    %v85 = vld [vmem:[#allocation5 + $0x48] sm:$0xff]
    %v86 = vld [vmem:[#allocation5 + $0x50] sm:$0xff]
    %v87 = vld [vmem:[#allocation5 + $0x58] sm:$0xff]
    %v88 = vld [vmem:[#allocation5 + $0x60] sm:$0xff]
    %v89 = vld [vmem:[#allocation5 + $0x68] sm:$0xff]
    %v90 = vld [vmem:[#allocation5 + $0x70] sm:$0xff]
    %v91 = vld [vmem:[#allocation5 + $0x78] sm:$0xff]
    %v92 = vld [vmem:[#allocation7] sm:$0xf]
    %v93 = vld [vmem:[#allocation7 + $0x4] sm:$0xf]
    %v94 = vld [vmem:[#allocation7 + $0x8] sm:$0xf]
    %v95 = vld [vmem:[#allocation7 + $0xc] sm:$0xf]
    %v96 = vld [vmem:[#allocation7 + $0x10] sm:$0xf]
    %v97 = vld [vmem:[#allocation7 + $0x14] sm:$0xf]
    %v98 = vld [vmem:[#allocation7 + $0x18] sm:$0xf]
    %v99 = vld [vmem:[#allocation7 + $0x1c] sm:$0xf]
    %v100 = vld [vmem:[#allocation7 + $0x20] sm:$0xf]
    %v101 = vld [vmem:[#allocation7 + $0x24] sm:$0xf]
    %v102 = vld [vmem:[#allocation7 + $0x28] sm:$0xf]
    %v103 = vld [vmem:[#allocation7 + $0x2c] sm:$0xf]
    %v104 = vld [vmem:[#allocation7 + $0x30] sm:$0xf]
    %v105 = vld [vmem:[#allocation7 + $0x34] sm:$0xf]
    %v106 = vld [vmem:[#allocation7 + $0x38] sm:$0xf]
    %v107 = vld [vmem:[#allocation7 + $0x3c] sm:$0xf]
    %v108 = vld [vmem:[#allocation8] sm:$0xff]
    %v111 = vunpack.c.l.b16 %v74
    %v112 = vunpack.c.l.b16 %v75
    %v113 = vpack.c.b16 %v112, %v111
    %v131 = vunpack.c.l.b16 %v76
    %v132 = vunpack.c.h.b16 %v76
    %v133 = vunpack.c.l.b16 %v77
    %v134 = vunpack.c.h.b16 %v77
    %v135 = vunpack.c.l.b16 %v78
    %v136 = vunpack.c.h.b16 %v78
    %v137 = vunpack.c.l.b16 %v79
    %v138 = vunpack.c.h.b16 %v79
    %v139 = vunpack.c.l.b16 %v80
    %v140 = vunpack.c.h.b16 %v80
    %v141 = vunpack.c.l.b16 %v81
    %v142 = vunpack.c.h.b16 %v81
    %v143 = vunpack.c.l.b16 %v82
    %v144 = vunpack.c.h.b16 %v82
    %v145 = vunpack.c.l.b16 %v83
    %v146 = vunpack.c.h.b16 %v83
    %v147 = vunpack.c.l.b16 %v84
    %v148 = vunpack.c.h.b16 %v84
    %v149 = vunpack.c.l.b16 %v85
    %v150 = vunpack.c.h.b16 %v85
    %v151 = vunpack.c.l.b16 %v86
    %v152 = vunpack.c.h.b16 %v86
    %v153 = vunpack.c.l.b16 %v87
    %v154 = vunpack.c.h.b16 %v87
    %v155 = vunpack.c.l.b16 %v88
    %v156 = vunpack.c.h.b16 %v88
    %v157 = vunpack.c.l.b16 %v89
    %v158 = vunpack.c.h.b16 %v89
    %v159 = vunpack.c.l.b16 %v90
    %v160 = vunpack.c.h.b16 %v90
    %v161 = vunpack.c.l.b16 %v91
    %v162 = vunpack.c.h.b16 %v91
    %v163 = vpack.c.b16 %v133, %v131
    %v164 = vpack.c.b16 %v134, %v132
    %v165 = vpack.c.b16 %v137, %v135
    %v166 = vpack.c.b16 %v138, %v136
    %v167 = vpack.c.b16 %v141, %v139
    %v168 = vpack.c.b16 %v142, %v140
    %v169 = vpack.c.b16 %v145, %v143
    %v170 = vpack.c.b16 %v146, %v144
    %v171 = vpack.c.b16 %v149, %v147
    %v172 = vpack.c.b16 %v150, %v148
    %v173 = vpack.c.b16 %v153, %v151
    %v174 = vpack.c.b16 %v154, %v152
    %v175 = vpack.c.b16 %v157, %v155
    %v176 = vpack.c.b16 %v158, %v156
    %v177 = vpack.c.b16 %v161, %v159
    %v178 = vpack.c.b16 %v162, %v160
    %195 = vmatprep.subr.bf16.mxu0 %v164
    %196 = vmatpush1.bf16.msra.mxu0 %v163
    %197 = vmatprep.subr.bf16.mxu0 %v166
    %198 = vmatpush1.bf16.msra.mxu0 %v165
    %199 = vmatprep.subr.bf16.mxu0 %v168
    %200 = vmatpush1.bf16.msra.mxu0 %v167
    %201 = vmatprep.subr.bf16.mxu0 %v170
    %202 = vmatpush1.bf16.msra.mxu0 %v169
    %203 = vmatprep.subr.bf16.mxu0 %v172
    %204 = vmatpush1.bf16.msra.mxu0 %v171
    %205 = vmatprep.subr.bf16.mxu0 %v174
    %206 = vmatpush1.bf16.msra.mxu0 %v173
    %207 = vmatprep.subr.bf16.mxu0 %v176
    %208 = vmatpush1.bf16.msra.mxu0 %v175
    %209 = vmatprep.subr.bf16.mxu0 %v178
    %210 = vmatpush1.bf16.msra.mxu0 %v177
    %211 = vmatprep.subr.bf16.mxu0 0
    %212 = vmatpush1.bf16.msra.mxu0 0
    %213 = vmatprep.subr.bf16.mxu0 0
    %214 = vmatpush1.bf16.msra.mxu0 0
    %215 = vmatprep.subr.bf16.mxu0 0
    %216 = vmatpush1.bf16.msra.mxu0 0
    %217 = vmatprep.subr.bf16.mxu0 0
    %218 = vmatpush1.bf16.msra.mxu0 0
    %219 = vmatprep.subr.bf16.mxu0 0
    %220 = vmatpush1.bf16.msra.mxu0 0
    %221 = vmatprep.subr.bf16.mxu0 0
    %222 = vmatpush1.bf16.msra.mxu0 0
    %223 = vmatprep.subr.bf16.mxu0 0
    %224 = vmatpush1.bf16.msra.mxu0 0
    %225 = vmatprep.subr.bf16.mxu0 0
    %226 = vmatpush1.bf16.msra.mxu0 0
    %227 = vmatprep.mubr.bf16.mxu0 0
    %228 = vmatmul.mubr.bf16.gmra.mrb[0].mxu0 %v113
    %v229 = vpop.f32.mrb[0].mxu0
    %v230 = vadd.f32 0.0, %v229
    %v231 = vpop.f32.mrb[0].mxu0
    %v232 = vadd.f32 0.0, %v231
    %v233 = vpop.f32.mrb[0].mxu0
    %v234 = vadd.f32 0.0, %v233
    %v235 = vpop.f32.mrb[0].mxu0
    %v236 = vadd.f32 0.0, %v235
    %237 = vdwg.mxu0
    %v238 = vlaneseq
    %v239 = vshrl.u32 %v238, 7
    %v240 = vsub.s32 0, %v239
    %v241 = vrot.slane %v108, %v240
    %v242 = vadd.f32 %v230, %v241
    %v243 = vadd.f32 %v234, %v241
    %244 = vadd.xlane.f32.xlu0 %v242
    %v245 = vpop.xlane.xlu0 %244
    %246 = vadd.xlane.f32.xlu0 %v243
    %v247 = vpop.xlane.xlu0 %246
    %v248 = vrcp.pop 128.0
    %v249 = vmul.f32 %v245, %v248
    %v250 = vmul.f32 %v247, %v248
    %v251 = vsub.f32 %v242, %v249
    %v252 = vsub.f32 %v243, %v250
    %v253 = vmul.f32 %v251, %v251
    %v254 = vmul.f32 %v252, %v252
    %255 = vadd.xlane.f32.xlu0 %v253
    %v256 = vpop.xlane.xlu0 %255
    %257 = vadd.xlane.f32.xlu0 %v254
    %v258 = vpop.xlane.xlu0 %257
    %v259 = vmul.f32 %v256, %v248
    %v260 = vmul.f32 %v258, %v248
    %v261 = vadd.f32 %v259, 1e-05
    %v262 = vadd.f32 %v260, 1e-05
    %v263 = vrsqrt.pop %v261
    %v264 = vrsqrt.pop %v262
    %v265 = vmul.f32 %v251, %v263
    %v266 = vmul.f32 %v252, %v264
    %v267 = vlaneseq
    %v268 = vshrl.u32 %v267, 7
    %v269 = vsub.s32 1, %v268
    %v270 = vrot.slane %v108, %v269
    %v271 = vmul.f32 %v265, %v270
    %v272 = vmul.f32 %v266, %v270
    %v273 = vlaneseq
    %v274 = vshrl.u32 %v273, 7
    %v275 = vsub.s32 2, %v274
    %v276 = vrot.slane %v108, %v275
    %v277 = vadd.f32 %v271, %v276
    %v278 = vadd.f32 %v272, %v276
    %v279 = vmax.f32 %v277, 0.0
    %v280 = vmax.f32 %v278, 0.0
    %v281 = vpack.c.bf16 %v280, %v279
    %v298 = vunpack.c.l.b16 %v92
    %v299 = vunpack.c.l.b16 %v93
    %v300 = vunpack.c.l.b16 %v94
    %v301 = vunpack.c.l.b16 %v95
    %v302 = vunpack.c.l.b16 %v96
    %v303 = vunpack.c.l.b16 %v97
    %v304 = vunpack.c.l.b16 %v98
    %v305 = vunpack.c.l.b16 %v99
    %v306 = vunpack.c.l.b16 %v100
    %v307 = vunpack.c.l.b16 %v101
    %v308 = vunpack.c.l.b16 %v102
    %v309 = vunpack.c.l.b16 %v103
    %v310 = vunpack.c.l.b16 %v104
    %v311 = vunpack.c.l.b16 %v105
    %v312 = vunpack.c.l.b16 %v106
    %v313 = vunpack.c.l.b16 %v107
    %v314 = vpack.c.b16 %v299, %v298
    %v315 = vpack.c.b16 %v301, %v300
    %v316 = vpack.c.b16 %v303, %v302
    %v317 = vpack.c.b16 %v305, %v304
    %v318 = vpack.c.b16 %v307, %v306
    %v319 = vpack.c.b16 %v309, %v308
    %v320 = vpack.c.b16 %v311, %v310
    %v321 = vpack.c.b16 %v313, %v312
    %330 = vmatprep.subr.bf16.mxu0 0
    %331 = vmatpush1.bf16.msra.mxu0 %v314
    %332 = vmatprep.subr.bf16.mxu0 0
    %333 = vmatpush1.bf16.msra.mxu0 %v315
    %334 = vmatprep.subr.bf16.mxu0 0
    %335 = vmatpush1.bf16.msra.mxu0 %v316
    %336 = vmatprep.subr.bf16.mxu0 0
    %337 = vmatpush1.bf16.msra.mxu0 %v317
    %338 = vmatprep.subr.bf16.mxu0 0
    %339 = vmatpush1.bf16.msra.mxu0 %v318
    %340 = vmatprep.subr.bf16.mxu0 0
    %341 = vmatpush1.bf16.msra.mxu0 %v319
    %342 = vmatprep.subr.bf16.mxu0 0
    %343 = vmatpush1.bf16.msra.mxu0 %v320
    %344 = vmatprep.subr.bf16.mxu0 0
    %345 = vmatpush1.bf16.msra.mxu0 %v321
    %346 = vmatprep.subr.bf16.mxu0 0
    %347 = vmatpush1.bf16.msra.mxu0 0
    %348 = vmatprep.subr.bf16.mxu0 0
    %349 = vmatpush1.bf16.msra.mxu0 0
    %350 = vmatprep.subr.bf16.mxu0 0
    %351 = vmatpush1.bf16.msra.mxu0 0
    %352 = vmatprep.subr.bf16.mxu0 0
    %353 = vmatpush1.bf16.msra.mxu0 0
    %354 = vmatprep.subr.bf16.mxu0 0
    %355 = vmatpush1.bf16.msra.mxu0 0
    %356 = vmatprep.subr.bf16.mxu0 0
    %357 = vmatpush1.bf16.msra.mxu0 0
    %358 = vmatprep.subr.bf16.mxu0 0
    %359 = vmatpush1.bf16.msra.mxu0 0
    %360 = vmatprep.subr.bf16.mxu0 0
    %361 = vmatpush1.bf16.msra.mxu0 0
    %362 = vmatprep.mubr.bf16.mxu0 0
    %363 = vmatmul.mubr.bf16.gmra.mrb[0].mxu0 %v281
    %v364 = vpop.f32.mrb[0].mxu0
    %v365 = vadd.f32 %v232, %v364
    %v366 = vpop.f32.mrb[0].mxu0
    %v367 = vpop.f32.mrb[0].mxu0
    %v368 = vadd.f32 %v236, %v367
    %v369 = vpop.f32.mrb[0].mxu0
    %370 = vdwg.mxu0
    %v371 = vlaneseq
    %v372 = vshrl.u32 %v371, 7
    %v373 = vsub.s32 3, %v372
    %v374 = vrot.slane %v108, %v373
    %v375 = vadd.f32 %v365, %v374
    %v376 = vadd.f32 %v368, %v374
    %377 = vadd.xlane.f32.xlu0 %v375
    %v378 = vpop.xlane.xlu0 %377
    %379 = vadd.xlane.f32.xlu0 %v376
    %v380 = vpop.xlane.xlu0 %379
    %v381 = vmul.f32 %v378, %v248
    %v382 = vmul.f32 %v380, %v248
    %v383 = vsub.f32 %v375, %v381
    %v384 = vsub.f32 %v376, %v382
    %v385 = vmul.f32 %v383, %v383
    %v386 = vmul.f32 %v384, %v384
    %387 = vadd.xlane.f32.xlu0 %v385
    %v388 = vpop.xlane.xlu0 %387
    %389 = vadd.xlane.f32.xlu0 %v386
    %v390 = vpop.xlane.xlu0 %389
    %v391 = vmul.f32 %v388, %v248
    %v392 = vmul.f32 %v390, %v248
    %v393 = vadd.f32 %v391, 1e-05
    %v394 = vadd.f32 %v392, 1e-05
    %v395 = vrsqrt.pop %v393
    %v396 = vrsqrt.pop %v394
    %v397 = vmul.f32 %v383, %v395
    %v398 = vmul.f32 %v384, %v396
    %v399 = vlaneseq
    %v400 = vshrl.u32 %v399, 7
    %v401 = vsub.s32 4, %v400
    %v402 = vrot.slane %v108, %v401
    %v403 = vmul.f32 %v397, %v402
    %v404 = vmul.f32 %v398, %v402
    %v405 = vlaneseq
    %v406 = vshrl.u32 %v405, 7
    %v407 = vsub.s32 5, %v406
    %v408 = vrot.slane %v108, %v407
    %v409 = vadd.f32 %v403, %v408
    %v410 = vadd.f32 %v404, %v408
    %v411 = vmax.f32 %v409, 0.0
    %v412 = vmax.f32 %v410, 0.0
    %413 = vst [vmem:[#allocation10] sm:$0xff] %v411
    %414 = vst [vmem:[#allocation10 + $0x8] sm:$0xff] %v412
    %s415 = scalar_lea.vmem [#allocation2], 8
    %v416 = vld [vmem:[%s415] sm:$0xf]
    %v417 = vld [vmem:[%s415 + $0x4] sm:$0xf]
    %s418 = scalar_lea.vmem [#allocation5], 128
    %v419 = vld [vmem:[%s418] sm:$0xff]
    %v420 = vld [vmem:[%s418 + $0x8] sm:$0xff]
    %v421 = vld [vmem:[%s418 + $0x10] sm:$0xff]
    %v422 = vld [vmem:[%s418 + $0x18] sm:$0xff]
    %v423 = vld [vmem:[%s418 + $0x20] sm:$0xff]
    %v424 = vld [vmem:[%s418 + $0x28] sm:$0xff]
    %v425 = vld [vmem:[%s418 + $0x30] sm:$0xff]
    %v426 = vld [vmem:[%s418 + $0x38] sm:$0xff]
    %v427 = vld [vmem:[%s418 + $0x40] sm:$0xff]
    %v428 = vld [vmem:[%s418 + $0x48] sm:$0xff]
    %v429 = vld [vmem:[%s418 + $0x50] sm:$0xff]
    %v430 = vld [vmem:[%s418 + $0x58] sm:$0xff]
    %v431 = vld [vmem:[%s418 + $0x60] sm:$0xff]
    %v432 = vld [vmem:[%s418 + $0x68] sm:$0xff]
    %v433 = vld [vmem:[%s418 + $0x70] sm:$0xff]
    %v434 = vld [vmem:[%s418 + $0x78] sm:$0xff]
    %s435 = scalar_lea.vmem [#allocation7], 64
    %v436 = vld [vmem:[%s435] sm:$0xf]
    %v437 = vld [vmem:[%s435 + $0x4] sm:$0xf]
    %v438 = vld [vmem:[%s435 + $0x8] sm:$0xf]
    %v439 = vld [vmem:[%s435 + $0xc] sm:$0xf]
    %v440 = vld [vmem:[%s435 + $0x10] sm:$0xf]
    %v441 = vld [vmem:[%s435 + $0x14] sm:$0xf]
    %v442 = vld [vmem:[%s435 + $0x18] sm:$0xf]
    %v443 = vld [vmem:[%s435 + $0x1c] sm:$0xf]
    %v444 = vld [vmem:[%s435 + $0x20] sm:$0xf]
    %v445 = vld [vmem:[%s435 + $0x24] sm:$0xf]
    %v446 = vld [vmem:[%s435 + $0x28] sm:$0xf]
    %v447 = vld [vmem:[%s435 + $0x2c] sm:$0xf]
    %v448 = vld [vmem:[%s435 + $0x30] sm:$0xf]
    %v449 = vld [vmem:[%s435 + $0x34] sm:$0xf]
    %v450 = vld [vmem:[%s435 + $0x38] sm:$0xf]
    %v451 = vld [vmem:[%s435 + $0x3c] sm:$0xf]
    %s452 = scalar_lea.vmem [#allocation8], 8
    %v453 = vld [vmem:[%s452] sm:$0xff]
    %v456 = vunpack.c.l.b16 %v416
    %v457 = vunpack.c.l.b16 %v417
    %v458 = vpack.c.b16 %v457, %v456
    %v476 = vunpack.c.l.b16 %v419
    %v477 = vunpack.c.h.b16 %v419
    %v478 = vunpack.c.l.b16 %v420
    %v479 = vunpack.c.h.b16 %v420
    %v480 = vunpack.c.l.b16 %v421
    %v481 = vunpack.c.h.b16 %v421
    %v482 = vunpack.c.l.b16 %v422
    %v483 = vunpack.c.h.b16 %v422
    %v484 = vunpack.c.l.b16 %v423
    %v485 = vunpack.c.h.b16 %v423
    %v486 = vunpack.c.l.b16 %v424
    %v487 = vunpack.c.h.b16 %v424
    %v488 = vunpack.c.l.b16 %v425
    %v489 = vunpack.c.h.b16 %v425
    %v490 = vunpack.c.l.b16 %v426
    %v491 = vunpack.c.h.b16 %v426
    %v492 = vunpack.c.l.b16 %v427
    %v493 = vunpack.c.h.b16 %v427
    %v494 = vunpack.c.l.b16 %v428
    %v495 = vunpack.c.h.b16 %v428
    %v496 = vunpack.c.l.b16 %v429
    %v497 = vunpack.c.h.b16 %v429
    %v498 = vunpack.c.l.b16 %v430
    %v499 = vunpack.c.h.b16 %v430
    %v500 = vunpack.c.l.b16 %v431
    %v501 = vunpack.c.h.b16 %v431
    %v502 = vunpack.c.l.b16 %v432
    %v503 = vunpack.c.h.b16 %v432
    %v504 = vunpack.c.l.b16 %v433
    %v505 = vunpack.c.h.b16 %v433
    %v506 = vunpack.c.l.b16 %v434
    %v507 = vunpack.c.h.b16 %v434
    %v508 = vpack.c.b16 %v478, %v476
    %v509 = vpack.c.b16 %v479, %v477
    %v510 = vpack.c.b16 %v482, %v480
    %v511 = vpack.c.b16 %v483, %v481
    %v512 = vpack.c.b16 %v486, %v484
    %v513 = vpack.c.b16 %v487, %v485
    %v514 = vpack.c.b16 %v490, %v488
    %v515 = vpack.c.b16 %v491, %v489
    %v516 = vpack.c.b16 %v494, %v492
    %v517 = vpack.c.b16 %v495, %v493
    %v518 = vpack.c.b16 %v498, %v496
    %v519 = vpack.c.b16 %v499, %v497
    %v520 = vpack.c.b16 %v502, %v500
    %v521 = vpack.c.b16 %v503, %v501
    %v522 = vpack.c.b16 %v506, %v504
    %v523 = vpack.c.b16 %v507, %v505
    %540 = vmatprep.subr.bf16.mxu0 %v509
    %541 = vmatpush1.bf16.msra.mxu0 %v508
    %542 = vmatprep.subr.bf16.mxu0 %v511
    %543 = vmatpush1.bf16.msra.mxu0 %v510
    %544 = vmatprep.subr.bf16.mxu0 %v513
    %545 = vmatpush1.bf16.msra.mxu0 %v512
    %546 = vmatprep.subr.bf16.mxu0 %v515
    %547 = vmatpush1.bf16.msra.mxu0 %v514
    %548 = vmatprep.subr.bf16.mxu0 %v517
    %549 = vmatpush1.bf16.msra.mxu0 %v516
    %550 = vmatprep.subr.bf16.mxu0 %v519
    %551 = vmatpush1.bf16.msra.mxu0 %v518
    %552 = vmatprep.subr.bf16.mxu0 %v521
    %553 = vmatpush1.bf16.msra.mxu0 %v520
    %554 = vmatprep.subr.bf16.mxu0 %v523
    %555 = vmatpush1.bf16.msra.mxu0 %v522
    %556 = vmatprep.subr.bf16.mxu0 0
    %557 = vmatpush1.bf16.msra.mxu0 0
    %558 = vmatprep.subr.bf16.mxu0 0
    %559 = vmatpush1.bf16.msra.mxu0 0
    %560 = vmatprep.subr.bf16.mxu0 0
    %561 = vmatpush1.bf16.msra.mxu0 0
    %562 = vmatprep.subr.bf16.mxu0 0
    %563 = vmatpush1.bf16.msra.mxu0 0
    %564 = vmatprep.subr.bf16.mxu0 0
    %565 = vmatpush1.bf16.msra.mxu0 0
    %566 = vmatprep.subr.bf16.mxu0 0
    %567 = vmatpush1.bf16.msra.mxu0 0
    %568 = vmatprep.subr.bf16.mxu0 0
    %569 = vmatpush1.bf16.msra.mxu0 0
    %570 = vmatprep.subr.bf16.mxu0 0
    %571 = vmatpush1.bf16.msra.mxu0 0
    %572 = vmatprep.mubr.bf16.mxu0 0
    %573 = vmatmul.mubr.bf16.gmra.mrb[0].mxu0 %v458
    %v574 = vpop.f32.mrb[0].mxu0
    %v575 = vadd.f32 0.0, %v574
    %v576 = vpop.f32.mrb[0].mxu0
    %v577 = vadd.f32 0.0, %v576
    %v578 = vpop.f32.mrb[0].mxu0
    %v579 = vadd.f32 0.0, %v578
    %v580 = vpop.f32.mrb[0].mxu0
    %v581 = vadd.f32 0.0, %v580
    %582 = vdwg.mxu0
    %v583 = vlaneseq
    %v584 = vshrl.u32 %v583, 7
    %v585 = vsub.s32 0, %v584
    %v586 = vrot.slane %v453, %v585
    %v587 = vadd.f32 %v575, %v586
    %v588 = vadd.f32 %v579, %v586
    %589 = vadd.xlane.f32.xlu0 %v587
    %v590 = vpop.xlane.xlu0 %589
    %591 = vadd.xlane.f32.xlu0 %v588
    %v592 = vpop.xlane.xlu0 %591
    %v593 = vmul.f32 %v590, %v248
    %v594 = vmul.f32 %v592, %v248
    %v595 = vsub.f32 %v587, %v593
    %v596 = vsub.f32 %v588, %v594
    %v597 = vmul.f32 %v595, %v595
    %v598 = vmul.f32 %v596, %v596
    %599 = vadd.xlane.f32.xlu0 %v597
    %v600 = vpop.xlane.xlu0 %599
    %601 = vadd.xlane.f32.xlu0 %v598
    %v602 = vpop.xlane.xlu0 %601
    %v603 = vmul.f32 %v600, %v248
    %v604 = vmul.f32 %v602, %v248
    %v605 = vadd.f32 %v603, 1e-05
    %v606 = vadd.f32 %v604, 1e-05
    %v607 = vrsqrt.pop %v605
    %v608 = vrsqrt.pop %v606
    %v609 = vmul.f32 %v595, %v607
    %v610 = vmul.f32 %v596, %v608
    %v611 = vlaneseq
    %v612 = vshrl.u32 %v611, 7
    %v613 = vsub.s32 1, %v612
    %v614 = vrot.slane %v453, %v613
    %v615 = vmul.f32 %v609, %v614
    %v616 = vmul.f32 %v610, %v614
    %v617 = vlaneseq
    %v618 = vshrl.u32 %v617, 7
    %v619 = vsub.s32 2, %v618
    %v620 = vrot.slane %v453, %v619
    %v621 = vadd.f32 %v615, %v620
    %v622 = vadd.f32 %v616, %v620
    %v623 = vmax.f32 %v621, 0.0
    %v624 = vmax.f32 %v622, 0.0
    %v625 = vpack.c.bf16 %v624, %v623
    %v642 = vunpack.c.l.b16 %v436
    %v643 = vunpack.c.l.b16 %v437
    %v644 = vunpack.c.l.b16 %v438
    %v645 = vunpack.c.l.b16 %v439
    %v646 = vunpack.c.l.b16 %v440
    %v647 = vunpack.c.l.b16 %v441
    %v648 = vunpack.c.l.b16 %v442
    %v649 = vunpack.c.l.b16 %v443
    %v650 = vunpack.c.l.b16 %v444
    %v651 = vunpack.c.l.b16 %v445
    %v652 = vunpack.c.l.b16 %v446
    %v653 = vunpack.c.l.b16 %v447
    %v654 = vunpack.c.l.b16 %v448
    %v655 = vunpack.c.l.b16 %v449
    %v656 = vunpack.c.l.b16 %v450
    %v657 = vunpack.c.l.b16 %v451
    %v658 = vpack.c.b16 %v643, %v642
    %v659 = vpack.c.b16 %v645, %v644
    %v660 = vpack.c.b16 %v647, %v646
    %v661 = vpack.c.b16 %v649, %v648
    %v662 = vpack.c.b16 %v651, %v650
    %v663 = vpack.c.b16 %v653, %v652
    %v664 = vpack.c.b16 %v655, %v654
    %v665 = vpack.c.b16 %v657, %v656
    %674 = vmatprep.subr.bf16.mxu0 0
    %675 = vmatpush1.bf16.msra.mxu0 %v658
    %676 = vmatprep.subr.bf16.mxu0 0
    %677 = vmatpush1.bf16.msra.mxu0 %v659
    %678 = vmatprep.subr.bf16.mxu0 0
    %679 = vmatpush1.bf16.msra.mxu0 %v660
    %680 = vmatprep.subr.bf16.mxu0 0
    %681 = vmatpush1.bf16.msra.mxu0 %v661
    %682 = vmatprep.subr.bf16.mxu0 0
    %683 = vmatpush1.bf16.msra.mxu0 %v662
    %684 = vmatprep.subr.bf16.mxu0 0
    %685 = vmatpush1.bf16.msra.mxu0 %v663
    %686 = vmatprep.subr.bf16.mxu0 0
    %687 = vmatpush1.bf16.msra.mxu0 %v664
    %688 = vmatprep.subr.bf16.mxu0 0
    %689 = vmatpush1.bf16.msra.mxu0 %v665
    %690 = vmatprep.subr.bf16.mxu0 0
    %691 = vmatpush1.bf16.msra.mxu0 0
    %692 = vmatprep.subr.bf16.mxu0 0
    %693 = vmatpush1.bf16.msra.mxu0 0
    %694 = vmatprep.subr.bf16.mxu0 0
    %695 = vmatpush1.bf16.msra.mxu0 0
    %696 = vmatprep.subr.bf16.mxu0 0
    %697 = vmatpush1.bf16.msra.mxu0 0
    %698 = vmatprep.subr.bf16.mxu0 0
    %699 = vmatpush1.bf16.msra.mxu0 0
    %700 = vmatprep.subr.bf16.mxu0 0
    %701 = vmatpush1.bf16.msra.mxu0 0
    %702 = vmatprep.subr.bf16.mxu0 0
    %703 = vmatpush1.bf16.msra.mxu0 0
    %704 = vmatprep.subr.bf16.mxu0 0
    %705 = vmatpush1.bf16.msra.mxu0 0
    %706 = vmatprep.mubr.bf16.mxu0 0
    %707 = vmatmul.mubr.bf16.gmra.mrb[0].mxu0 %v625
    %v708 = vpop.f32.mrb[0].mxu0
    %v709 = vadd.f32 %v577, %v708
    %v710 = vpop.f32.mrb[0].mxu0
    %v711 = vpop.f32.mrb[0].mxu0
    %v712 = vadd.f32 %v581, %v711
    %v713 = vpop.f32.mrb[0].mxu0
    %714 = vdwg.mxu0
    %v715 = vlaneseq
    %v716 = vshrl.u32 %v715, 7
    %v717 = vsub.s32 3, %v716
    %v718 = vrot.slane %v453, %v717
    %v719 = vadd.f32 %v709, %v718
    %v720 = vadd.f32 %v712, %v718
    %721 = vadd.xlane.f32.xlu0 %v719
    %v722 = vpop.xlane.xlu0 %721
    %723 = vadd.xlane.f32.xlu0 %v720
    %v724 = vpop.xlane.xlu0 %723
    %v725 = vmul.f32 %v722, %v248
    %v726 = vmul.f32 %v724, %v248
    %v727 = vsub.f32 %v719, %v725
    %v728 = vsub.f32 %v720, %v726
    %v729 = vmul.f32 %v727, %v727
    %v730 = vmul.f32 %v728, %v728
    %731 = vadd.xlane.f32.xlu0 %v729
    %v732 = vpop.xlane.xlu0 %731
    %733 = vadd.xlane.f32.xlu0 %v730
    %v734 = vpop.xlane.xlu0 %733
    %v735 = vmul.f32 %v732, %v248
    %v736 = vmul.f32 %v734, %v248
    %v737 = vadd.f32 %v735, 1e-05
    %v738 = vadd.f32 %v736, 1e-05
    %v739 = vrsqrt.pop %v737
    %v740 = vrsqrt.pop %v738
    %v741 = vmul.f32 %v727, %v739
    %v742 = vmul.f32 %v728, %v740
    %v743 = vlaneseq
    %v744 = vshrl.u32 %v743, 7
    %v745 = vsub.s32 4, %v744
    %v746 = vrot.slane %v453, %v745
    %v747 = vmul.f32 %v741, %v746
    %v748 = vmul.f32 %v742, %v746
    %v749 = vlaneseq
    %v750 = vshrl.u32 %v749, 7
    %v751 = vsub.s32 5, %v750
    %v752 = vrot.slane %v453, %v751
    %v753 = vadd.f32 %v747, %v752
    %v754 = vadd.f32 %v748, %v752
    %v755 = vmax.f32 %v753, 0.0
    %v756 = vmax.f32 %v754, 0.0
    %s757 = scalar_lea.vmem [#allocation10], 16
    %758 = vst [vmem:[%s757] sm:$0xff] %v755
    %759 = vst [vmem:[%s757 + $0x8] sm:$0xff] %v756
    %s760 = scalar_lea.vmem [#allocation2], 16
    %v761 = vld [vmem:[%s760] sm:$0xf]
    %v762 = vld [vmem:[%s760 + $0x4] sm:$0xf]
    %s763 = scalar_lea.vmem [#allocation5], 256
    %v764 = vld [vmem:[%s763] sm:$0xff]
    %v765 = vld [vmem:[%s763 + $0x8] sm:$0xff]
    %v766 = vld [vmem:[%s763 + $0x10] sm:$0xff]
    %v767 = vld [vmem:[%s763 + $0x18] sm:$0xff]
    %v768 = vld [vmem:[%s763 + $0x20] sm:$0xff]
    %v769 = vld [vmem:[%s763 + $0x28] sm:$0xff]
    %v770 = vld [vmem:[%s763 + $0x30] sm:$0xff]
    %v771 = vld [vmem:[%s763 + $0x38] sm:$0xff]
    %v772 = vld [vmem:[%s763 + $0x40] sm:$0xff]
    %v773 = vld [vmem:[%s763 + $0x48] sm:$0xff]
    %v774 = vld [vmem:[%s763 + $0x50] sm:$0xff]
    %v775 = vld [vmem:[%s763 + $0x58] sm:$0xff]
    %v776 = vld [vmem:[%s763 + $0x60] sm:$0xff]
    %v777 = vld [vmem:[%s763 + $0x68] sm:$0xff]
    %v778 = vld [vmem:[%s763 + $0x70] sm:$0xff]
    %v779 = vld [vmem:[%s763 + $0x78] sm:$0xff]
    %s780 = scalar_lea.vmem [#allocation7], 128
    %v781 = vld [vmem:[%s780] sm:$0xf]
    %v782 = vld [vmem:[%s780 + $0x4] sm:$0xf]
    %v783 = vld [vmem:[%s780 + $0x8] sm:$0xf]
    %v784 = vld [vmem:[%s780 + $0xc] sm:$0xf]
    %v785 = vld [vmem:[%s780 + $0x10] sm:$0xf]
    %v786 = vld [vmem:[%s780 + $0x14] sm:$0xf]
    %v787 = vld [vmem:[%s780 + $0x18] sm:$0xf]
    %v788 = vld [vmem:[%s780 + $0x1c] sm:$0xf]
    %v789 = vld [vmem:[%s780 + $0x20] sm:$0xf]
    %v790 = vld [vmem:[%s780 + $0x24] sm:$0xf]
    %v791 = vld [vmem:[%s780 + $0x28] sm:$0xf]
    %v792 = vld [vmem:[%s780 + $0x2c] sm:$0xf]
    %v793 = vld [vmem:[%s780 + $0x30] sm:$0xf]
    %v794 = vld [vmem:[%s780 + $0x34] sm:$0xf]
    %v795 = vld [vmem:[%s780 + $0x38] sm:$0xf]
    %v796 = vld [vmem:[%s780 + $0x3c] sm:$0xf]
    %s797 = scalar_lea.vmem [#allocation8], 16
    %v798 = vld [vmem:[%s797] sm:$0xff]
    %v801 = vunpack.c.l.b16 %v761
    %v802 = vunpack.c.l.b16 %v762
    %v803 = vpack.c.b16 %v802, %v801
    %v821 = vunpack.c.l.b16 %v764
    %v822 = vunpack.c.h.b16 %v764
    %v823 = vunpack.c.l.b16 %v765
    %v824 = vunpack.c.h.b16 %v765
    %v825 = vunpack.c.l.b16 %v766
    %v826 = vunpack.c.h.b16 %v766
    %v827 = vunpack.c.l.b16 %v767
    %v828 = vunpack.c.h.b16 %v767
    %v829 = vunpack.c.l.b16 %v768
    %v830 = vunpack.c.h.b16 %v768
    %v831 = vunpack.c.l.b16 %v769
    %v832 = vunpack.c.h.b16 %v769
    %v833 = vunpack.c.l.b16 %v770
    %v834 = vunpack.c.h.b16 %v770
    %v835 = vunpack.c.l.b16 %v771
    %v836 = vunpack.c.h.b16 %v771
    %v837 = vunpack.c.l.b16 %v772
    %v838 = vunpack.c.h.b16 %v772
    %v839 = vunpack.c.l.b16 %v773
    %v840 = vunpack.c.h.b16 %v773
    %v841 = vunpack.c.l.b16 %v774
    %v842 = vunpack.c.h.b16 %v774
    %v843 = vunpack.c.l.b16 %v775
    %v844 = vunpack.c.h.b16 %v775
    %v845 = vunpack.c.l.b16 %v776
    %v846 = vunpack.c.h.b16 %v776
    %v847 = vunpack.c.l.b16 %v777
    %v848 = vunpack.c.h.b16 %v777
    %v849 = vunpack.c.l.b16 %v778
    %v850 = vunpack.c.h.b16 %v778
    %v851 = vunpack.c.l.b16 %v779
    %v852 = vunpack.c.h.b16 %v779
    %v853 = vpack.c.b16 %v823, %v821
    %v854 = vpack.c.b16 %v824, %v822
    %v855 = vpack.c.b16 %v827, %v825
    %v856 = vpack.c.b16 %v828, %v826
    %v857 = vpack.c.b16 %v831, %v829
    %v858 = vpack.c.b16 %v832, %v830
    %v859 = vpack.c.b16 %v835, %v833
    %v860 = vpack.c.b16 %v836, %v834
    %v861 = vpack.c.b16 %v839, %v837
    %v862 = vpack.c.b16 %v840, %v838
    %v863 = vpack.c.b16 %v843, %v841
    %v864 = vpack.c.b16 %v844, %v842
    %v865 = vpack.c.b16 %v847, %v845
    %v866 = vpack.c.b16 %v848, %v846
    %v867 = vpack.c.b16 %v851, %v849
    %v868 = vpack.c.b16 %v852, %v850
    %885 = vmatprep.subr.bf16.mxu0 %v854
    %886 = vmatpush1.bf16.msra.mxu0 %v853
    %887 = vmatprep.subr.bf16.mxu0 %v856
    %888 = vmatpush1.bf16.msra.mxu0 %v855
    %889 = vmatprep.subr.bf16.mxu0 %v858
    %890 = vmatpush1.bf16.msra.mxu0 %v857
    %891 = vmatprep.subr.bf16.mxu0 %v860
    %892 = vmatpush1.bf16.msra.mxu0 %v859
    %893 = vmatprep.subr.bf16.mxu0 %v862
    %894 = vmatpush1.bf16.msra.mxu0 %v861
    %895 = vmatprep.subr.bf16.mxu0 %v864
    %896 = vmatpush1.bf16.msra.mxu0 %v863
    %897 = vmatprep.subr.bf16.mxu0 %v866
    %898 = vmatpush1.bf16.msra.mxu0 %v865
    %899 = vmatprep.subr.bf16.mxu0 %v868
    %900 = vmatpush1.bf16.msra.mxu0 %v867
    %901 = vmatprep.subr.bf16.mxu0 0
    %902 = vmatpush1.bf16.msra.mxu0 0
    %903 = vmatprep.subr.bf16.mxu0 0
    %904 = vmatpush1.bf16.msra.mxu0 0
    %905 = vmatprep.subr.bf16.mxu0 0
    %906 = vmatpush1.bf16.msra.mxu0 0
    %907 = vmatprep.subr.bf16.mxu0 0
    %908 = vmatpush1.bf16.msra.mxu0 0
    %909 = vmatprep.subr.bf16.mxu0 0
    %910 = vmatpush1.bf16.msra.mxu0 0
    %911 = vmatprep.subr.bf16.mxu0 0
    %912 = vmatpush1.bf16.msra.mxu0 0
    %913 = vmatprep.subr.bf16.mxu0 0
    %914 = vmatpush1.bf16.msra.mxu0 0
    %915 = vmatprep.subr.bf16.mxu0 0
    %916 = vmatpush1.bf16.msra.mxu0 0
    %917 = vmatprep.mubr.bf16.mxu0 0
    %918 = vmatmul.mubr.bf16.gmra.mrb[0].mxu0 %v803
    %v919 = vpop.f32.mrb[0].mxu0
    %v920 = vadd.f32 0.0, %v919
    %v921 = vpop.f32.mrb[0].mxu0
    %v922 = vadd.f32 0.0, %v921
    %v923 = vpop.f32.mrb[0].mxu0
    %v924 = vadd.f32 0.0, %v923
    %v925 = vpop.f32.mrb[0].mxu0
    %v926 = vadd.f32 0.0, %v925
    %927 = vdwg.mxu0
    %v928 = vlaneseq
    %v929 = vshrl.u32 %v928, 7
    %v930 = vsub.s32 0, %v929
    %v931 = vrot.slane %v798, %v930
    %v932 = vadd.f32 %v920, %v931
    %v933 = vadd.f32 %v924, %v931
    %934 = vadd.xlane.f32.xlu0 %v932
    %v935 = vpop.xlane.xlu0 %934
    %936 = vadd.xlane.f32.xlu0 %v933
    %v937 = vpop.xlane.xlu0 %936
    %v938 = vmul.f32 %v935, %v248
    %v939 = vmul.f32 %v937, %v248
    %v940 = vsub.f32 %v932, %v938
    %v941 = vsub.f32 %v933, %v939
    %v942 = vmul.f32 %v940, %v940
    %v943 = vmul.f32 %v941, %v941
    %944 = vadd.xlane.f32.xlu0 %v942
    %v945 = vpop.xlane.xlu0 %944
    %946 = vadd.xlane.f32.xlu0 %v943
    %v947 = vpop.xlane.xlu0 %946
    %v948 = vmul.f32 %v945, %v248
    %v949 = vmul.f32 %v947, %v248
    %v950 = vadd.f32 %v948, 1e-05
    %v951 = vadd.f32 %v949, 1e-05
    %v952 = vrsqrt.pop %v950
    %v953 = vrsqrt.pop %v951
    %v954 = vmul.f32 %v940, %v952
    %v955 = vmul.f32 %v941, %v953
    %v956 = vlaneseq
    %v957 = vshrl.u32 %v956, 7
    %v958 = vsub.s32 1, %v957
    %v959 = vrot.slane %v798, %v958
    %v960 = vmul.f32 %v954, %v959
    %v961 = vmul.f32 %v955, %v959
    %v962 = vlaneseq
    %v963 = vshrl.u32 %v962, 7
    %v964 = vsub.s32 2, %v963
    %v965 = vrot.slane %v798, %v964
    %v966 = vadd.f32 %v960, %v965
    %v967 = vadd.f32 %v961, %v965
    %v968 = vmax.f32 %v966, 0.0
    %v969 = vmax.f32 %v967, 0.0
    %v970 = vpack.c.bf16 %v969, %v968
    %v987 = vunpack.c.l.b16 %v781
    %v988 = vunpack.c.l.b16 %v782
    %v989 = vunpack.c.l.b16 %v783
    %v990 = vunpack.c.l.b16 %v784
    %v991 = vunpack.c.l.b16 %v785
    %v992 = vunpack.c.l.b16 %v786
    %v993 = vunpack.c.l.b16 %v787
    %v994 = vunpack.c.l.b16 %v788
    %v995 = vunpack.c.l.b16 %v789
    %v996 = vunpack.c.l.b16 %v790
    %v997 = vunpack.c.l.b16 %v791
    %v998 = vunpack.c.l.b16 %v792
    %v999 = vunpack.c.l.b16 %v793
    %v1000 = vunpack.c.l.b16 %v794
    %v1001 = vunpack.c.l.b16 %v795
    %v1002 = vunpack.c.l.b16 %v796
    %v1003 = vpack.c.b16 %v988, %v987
    %v1004 = vpack.c.b16 %v990, %v989
    %v1005 = vpack.c.b16 %v992, %v991
    %v1006 = vpack.c.b16 %v994, %v993
    %v1007 = vpack.c.b16 %v996, %v995
    %v1008 = vpack.c.b16 %v998, %v997
    %v1009 = vpack.c.b16 %v1000, %v999
    %v1010 = vpack.c.b16 %v1002, %v1001
    %1019 = vmatprep.subr.bf16.mxu0 0
    %1020 = vmatpush1.bf16.msra.mxu0 %v1003
    %1021 = vmatprep.subr.bf16.mxu0 0
    %1022 = vmatpush1.bf16.msra.mxu0 %v1004
    %1023 = vmatprep.subr.bf16.mxu0 0
    %1024 = vmatpush1.bf16.msra.mxu0 %v1005
    %1025 = vmatprep.subr.bf16.mxu0 0
    %1026 = vmatpush1.bf16.msra.mxu0 %v1006
    %1027 = vmatprep.subr.bf16.mxu0 0
    %1028 = vmatpush1.bf16.msra.mxu0 %v1007
    %1029 = vmatprep.subr.bf16.mxu0 0
    %1030 = vmatpush1.bf16.msra.mxu0 %v1008
    %1031 = vmatprep.subr.bf16.mxu0 0
    %1032 = vmatpush1.bf16.msra.mxu0 %v1009
    %1033 = vmatprep.subr.bf16.mxu0 0
    %1034 = vmatpush1.bf16.msra.mxu0 %v1010
    %1035 = vmatprep.subr.bf16.mxu0 0
    %1036 = vmatpush1.bf16.msra.mxu0 0
    %1037 = vmatprep.subr.bf16.mxu0 0
    %1038 = vmatpush1.bf16.msra.mxu0 0
    %1039 = vmatprep.subr.bf16.mxu0 0
    %1040 = vmatpush1.bf16.msra.mxu0 0
    %1041 = vmatprep.subr.bf16.mxu0 0
    %1042 = vmatpush1.bf16.msra.mxu0 0
    %1043 = vmatprep.subr.bf16.mxu0 0
    %1044 = vmatpush1.bf16.msra.mxu0 0
    %1045 = vmatprep.subr.bf16.mxu0 0
    %1046 = vmatpush1.bf16.msra.mxu0 0
    %1047 = vmatprep.subr.bf16.mxu0 0
    %1048 = vmatpush1.bf16.msra.mxu0 0
    %1049 = vmatprep.subr.bf16.mxu0 0
    %1050 = vmatpush1.bf16.msra.mxu0 0
    %1051 = vmatprep.mubr.bf16.mxu0 0
    %1052 = vmatmul.mubr.bf16.gmra.mrb[0].mxu0 %v970
    %v1053 = vpop.f32.mrb[0].mxu0
    %v1054 = vadd.f32 %v922, %v1053
    %v1055 = vpop.f32.mrb[0].mxu0
    %v1056 = vpop.f32.mrb[0].mxu0
    %v1057 = vadd.f32 %v926, %v1056
    %v1058 = vpop.f32.mrb[0].mxu0
    %1059 = vdwg.mxu0
    %v1060 = vlaneseq
    %v1061 = vshrl.u32 %v1060, 7
    %v1062 = vsub.s32 3, %v1061
    %v1063 = vrot.slane %v798, %v1062
    %v1064 = vadd.f32 %v1054, %v1063
    %v1065 = vadd.f32 %v1057, %v1063
    %1066 = vadd.xlane.f32.xlu0 %v1064
    %v1067 = vpop.xlane.xlu0 %1066
    %1068 = vadd.xlane.f32.xlu0 %v1065
    %v1069 = vpop.xlane.xlu0 %1068
    %v1070 = vmul.f32 %v1067, %v248
    %v1071 = vmul.f32 %v1069, %v248
    %v1072 = vsub.f32 %v1064, %v1070
    %v1073 = vsub.f32 %v1065, %v1071
    %v1074 = vmul.f32 %v1072, %v1072
    %v1075 = vmul.f32 %v1073, %v1073
    %1076 = vadd.xlane.f32.xlu0 %v1074
    %v1077 = vpop.xlane.xlu0 %1076
    %1078 = vadd.xlane.f32.xlu0 %v1075
    %v1079 = vpop.xlane.xlu0 %1078
    %v1080 = vmul.f32 %v1077, %v248
    %v1081 = vmul.f32 %v1079, %v248
    %v1082 = vadd.f32 %v1080, 1e-05
    %v1083 = vadd.f32 %v1081, 1e-05
    %v1084 = vrsqrt.pop %v1082
    %v1085 = vrsqrt.pop %v1083
    %v1086 = vmul.f32 %v1072, %v1084
    %v1087 = vmul.f32 %v1073, %v1085
    %v1088 = vlaneseq
    %v1089 = vshrl.u32 %v1088, 7
    %v1090 = vsub.s32 4, %v1089
    %v1091 = vrot.slane %v798, %v1090
    %v1092 = vmul.f32 %v1086, %v1091
    %v1093 = vmul.f32 %v1087, %v1091
    %v1094 = vlaneseq
    %v1095 = vshrl.u32 %v1094, 7
    %v1096 = vsub.s32 5, %v1095
    %v1097 = vrot.slane %v798, %v1096
    %v1098 = vadd.f32 %v1092, %v1097
    %v1099 = vadd.f32 %v1093, %v1097
    %v1100 = vmax.f32 %v1098, 0.0
    %v1101 = vmax.f32 %v1099, 0.0
    %s1102 = scalar_lea.vmem [#allocation10], 32
    %1103 = vst [vmem:[%s1102] sm:$0xff] %v1100
    %1104 = vst [vmem:[%s1102 + $0x8] sm:$0xff] %v1101
    // Predicated region
    $region34: #{tpu_custom_call.1} parent=1 // pred_check
      _
    $region35: #{tpu_custom_call.1} parent=1 // pred_check_branch
      %1106 = sbr.rel (0) target = $region37
    $region36: #{tpu_custom_call.1} parent=1 // pred_region
      %s1108 = ssub.s32 768, 768
      %1109 = vsyncadd [#allocation4], %s1108
      %s1110 = sshll.u32 [#allocation10], 4
      %s1111 = int_to_ptr.vmem [resolvable:$true] %s1110
      %1116 = dma.vmem_to_hbm [thread:$0]  %s1111, 768, %s4, [#allocation4], 128, 128, 8
    $region37: #{tpu_custom_call.1} parent=1 // pred_fallthru
      _
    // Predicated region
    $region38: #{tpu_custom_call.1} parent=1 // pred_check
      _
    $region39: #{tpu_custom_call.1} parent=1 // pred_check_branch
      %1118 = sbr.rel (0) target = $region41
    $region40: #{tpu_custom_call.1} parent=1 // pred_region
      %1119 = dma.done [#allocation4], 768
    $region41: #{tpu_custom_call.1} parent=1 // pred_fallthru
      _
    %1120 = vsyncpa [#allocation3], 1
    %1121 = vsyncpa [#allocation6], 1
    %1122 = vsyncpa [#allocation9], 1
    %1123 = vsyncpa [#allocation4], 1

</llo_original>
